<compile_context>
chip_gen: v6e
topology: v6e:2x2x1
jax: 0.10.0
libtpu: 0.0.40
codegen_flags: <defaults>
</compile_context>

<pallas_src>
import functools
import math

import jax
import jax.numpy as jnp
from jax.experimental import pallas as pl
from jax.experimental.pallas import tpu as pltpu


def _round_up(x: int, m: int) -> int:
    return ((x + m - 1) // m) * m


# Per pallas_call cap on scalar-prefetched ids (128 KiB of int32 in SMEM).
_MAX_SMEM_IDS = 32768


def _make_embedding_kernel(d_model: int, vocab: int, block_tokens: int):
    scale = math.sqrt(d_model)

    def emb_kernel(ids_ref, lut_hbm, out_ref, copy_sem):
        # ids_ref : SMEM (chunk_tokens,) int32       (scalar prefetch)
        # lut_hbm : HBM  (vocab, d_model)            (memory_space=pl.ANY)
        # out_ref : VMEM (block_tokens, d_model)     (auto-pipelined out tile)
        # copy_sem: single DMA semaphore shared by all row gathers of a step
        blk = pl.program_id(0)
        base = blk * block_tokens

        # Issue every row-gather DMA up front (all T random-row HBM fetches in
        # flight simultaneously), landing directly in the output tile.
        for r in range(block_tokens):
            tok = ids_ref[base + r]
            tok = jnp.minimum(jnp.maximum(tok, 0), vocab - 1)  # OOB guard
            pltpu.make_async_copy(
                lut_hbm.at[pl.ds(tok, 1), :],
                out_ref.at[pl.ds(r, 1), :],
                copy_sem,
            ).start()

        # ONE aggregate wait: DMA semaphores count bytes, so a descriptor
        # covering the full (T, d_model) tile waits for all T row copies.
        pltpu.make_async_copy(out_ref, out_ref, copy_sem).wait()

        # Fused sqrt(d_model) scale, in place (VPU has huge slack here).
        out_ref[...] = (out_ref[...] * scale).astype(out_ref.dtype)

    return emb_kernel


@functools.partial(jax.jit, static_argnames=("block_tokens",))
def embeddings_forward(token_ids: jax.Array, lut: jax.Array,
                       *, block_tokens: int = 256) -> jax.Array:
    """Equivalent of Embeddings.forward: lut[token_ids] * sqrt(d_model).

    token_ids: int array of shape (batch, seq)
    lut:       (vocab, d_model) embedding table
    returns:   (batch, seq, d_model) array of lut.dtype
    """
    batch, seq = token_ids.shape
    vocab, d_model = lut.shape
    n_tokens = batch * seq

    itemsize = int(jnp.dtype(lut.dtype).itemsize)
    # Sublane packing of the table dtype: 8 (f32) / 16 (bf16) / 32 (int8/fp8).
    pack = max(8, 32 // itemsize)
    row_bytes = d_model * itemsize

    # Token tile: as big as requested but no bigger than needed, capped so the
    # double-buffered output tile stays within ~32 MiB of VMEM (v7x-safe), and
    # rounded to the dtype's sublane packing (unmasked vst on all chips).
    t = min(block_tokens, _round_up(n_tokens, pack))
    vmem_cap_rows = max(pack, ((16 << 20) // row_bytes) // pack * pack)
    t = max(pack, _round_up(min(t, vmem_cap_rows), pack))

    n_padded = _round_up(n_tokens, t)
    flat_ids = token_ids.reshape(n_tokens).astype(jnp.int32)
    if n_padded != n_tokens:
        flat_ids = jnp.pad(flat_ids, (0, n_padded - n_tokens))

    kernel = _make_embedding_kernel(d_model, vocab, t)
    tile_bytes = t * row_bytes
    # Explicit scoped-VMEM limit from the actual footprint (2x out tile for
    # the pipeline's double buffer + margin), never above 48 MiB.
    vmem_limit = int(min(48 << 20, max(16 << 20, 2 * tile_bytes + (2 << 20))))

    def run_chunk(ids_chunk: jax.Array) -> jax.Array:
        n_blocks = ids_chunk.shape[0] // t
        grid_spec = pltpu.PrefetchScalarGridSpec(
            num_scalar_prefetch=1,
            grid=(n_blocks,),
            in_specs=[
                # Embedding table stays in HBM; rows gathered manually by DMA.
                pl.BlockSpec(memory_space=pl.ANY),
            ],
            out_specs=pl.BlockSpec((t, d_model), lambda i, ids: (i, 0)),
            scratch_shapes=[pltpu.SemaphoreType.DMA(())],
        )
        return pl.pallas_call(
            kernel,
            out_shape=jax.ShapeDtypeStruct((ids_chunk.shape[0], d_model),
                                           lut.dtype),
            grid_spec=grid_spec,
            compiler_params=pltpu.CompilerParams(
                # Disjoint output tiles, no cross-step scratch dependency ->
                # safe to shard across TensorCores.
                # TODO(synk): try pltpu.CORE_PARALLEL on v7x (2 TCs/chip).
                dimension_semantics=("parallel",),
                vmem_limit_bytes=vmem_limit,
            ),
        )(ids_chunk, lut)

    # Chunk long sequences so the scalar-prefetched ids never blow SMEM.
    chunk = max(t, (_MAX_SMEM_IDS // t) * t)
    outs = [run_chunk(flat_ids[s:s + chunk]) for s in range(0, n_padded, chunk)]
    out_flat = outs[0] if len(outs) == 1 else jnp.concatenate(outs, axis=0)

    # TODO(synk): for bf16/int8 tables, gather rows through a uint32 view of
    # the table so each row DMA is a full packed-sublane write.
    return out_flat[:n_tokens].reshape(batch, seq, d_model)


if __name__ == "__main__":
    # Small, deterministic setup consistent with nn.Embedding(vocab, d_model).
    batch, seq = 2, 8
    vocab, d_model = 50, 32

    key = jax.random.PRNGKey(0)
    k_lut, k_ids = jax.random.split(key)

    # nn.Embedding default init ~ N(0, 1); deterministic synthetic weights.
    lut = jax.random.normal(k_lut, (vocab, d_model), dtype=jnp.float32)
    token_ids = jax.random.randint(k_ids, (batch, seq), 0, vocab,
                                   dtype=jnp.int32)

    out = embeddings_forward(token_ids, lut)
    out = jax.block_until_ready(out)

    # Reference check against plain JAX gather.
    ref = lut[token_ids] * math.sqrt(d_model)
    assert out.shape == (batch, seq, d_model)
    assert jnp.allclose(out, ref, atol=1e-6, rtol=1e-6)

    print("KERNEL_OK")
</pallas_src>

<mosaic_0001>
module attributes {stable_mosaic.version = 11 : i64} {
  func.func @emb_kernel(%arg0: i32, %arg1: memref<16xi32, #tpu.memory_space<smem>>, %arg2: memref<50x32xf32, #tpu.memory_space<any>>, %arg3: memref<16x32xf32, #tpu.memory_space<vmem>>, %arg4: memref<!tpu.dma_semaphore, #tpu.memory_space<semaphore_mem>>) attributes {dimension_semantics = [#tpu.dimension_semantics<parallel>], iteration_bounds = array<i64: 1>, scalar_prefetch = 1 : i64, scratch_operands = 1 : i64, tpu.core_type = #tpu.core_type<tc>, window_params = [{}, {transform_indices = @transform_1, window_bounds = array<i64: 16, 32>}]} {
    %c16_i32 = arith.constant 16 : i32
    %0 = arith.muli %arg0, %c16_i32 : i32
    %c0_i32 = arith.constant 0 : i32
    %1 = arith.addi %0, %c0_i32 : i32
    %2 = arith.index_cast %1 : i32 to index
    %3 = memref.load %arg1[%2] : memref<16xi32, #tpu.memory_space<smem>>
    %c0_i32_0 = arith.constant 0 : i32
    %4 = arith.maxsi %3, %c0_i32_0 : i32
    %c49_i32 = arith.constant 49 : i32
    %5 = arith.minsi %4, %c49_i32 : i32
    %c0_i32_1 = arith.constant 0 : i32
    %6 = tpu.memref_slice %arg2[%5, %c0_i32_1] : memref<50x32xf32, #tpu.memory_space<any>> -> memref<1x32xf32, #tpu.memory_space<any>>
    %c0_i32_2 = arith.constant 0 : i32
    %c0_i32_3 = arith.constant 0 : i32
    %7 = tpu.memref_slice %arg3[%c0_i32_2, %c0_i32_3] : memref<16x32xf32, #tpu.memory_space<vmem>> -> memref<1x32xf32, #tpu.memory_space<vmem>>
    tpu.enqueue_dma source(%6 : memref<1x32xf32, #tpu.memory_space<any>>) target(%7 : memref<1x32xf32, #tpu.memory_space<vmem>>) target_semaphore(%arg4 : memref<!tpu.dma_semaphore, #tpu.memory_space<semaphore_mem>>)
    %c1_i32 = arith.constant 1 : i32
    %8 = arith.addi %0, %c1_i32 : i32
    %9 = arith.index_cast %8 : i32 to index
    %10 = memref.load %arg1[%9] : memref<16xi32, #tpu.memory_space<smem>>
    %c0_i32_4 = arith.constant 0 : i32
    %11 = arith.maxsi %10, %c0_i32_4 : i32
    %c49_i32_5 = arith.constant 49 : i32
    %12 = arith.minsi %11, %c49_i32_5 : i32
    %c0_i32_6 = arith.constant 0 : i32
    %13 = tpu.memref_slice %arg2[%12, %c0_i32_6] : memref<50x32xf32, #tpu.memory_space<any>> -> memref<1x32xf32, #tpu.memory_space<any>>
    %c1_i32_7 = arith.constant 1 : i32
    %c0_i32_8 = arith.constant 0 : i32
    %14 = tpu.memref_slice %arg3[%c1_i32_7, %c0_i32_8] : memref<16x32xf32, #tpu.memory_space<vmem>> -> memref<1x32xf32, #tpu.memory_space<vmem>>
    tpu.enqueue_dma source(%13 : memref<1x32xf32, #tpu.memory_space<any>>) target(%14 : memref<1x32xf32, #tpu.memory_space<vmem>>) target_semaphore(%arg4 : memref<!tpu.dma_semaphore, #tpu.memory_space<semaphore_mem>>)
    %c2_i32 = arith.constant 2 : i32
    %15 = arith.addi %0, %c2_i32 : i32
    %16 = arith.index_cast %15 : i32 to index
    %17 = memref.load %arg1[%16] : memref<16xi32, #tpu.memory_space<smem>>
    %c0_i32_9 = arith.constant 0 : i32
    %18 = arith.maxsi %17, %c0_i32_9 : i32
    %c49_i32_10 = arith.constant 49 : i32
    %19 = arith.minsi %18, %c49_i32_10 : i32
    %c0_i32_11 = arith.constant 0 : i32
    %20 = tpu.memref_slice %arg2[%19, %c0_i32_11] : memref<50x32xf32, #tpu.memory_space<any>> -> memref<1x32xf32, #tpu.memory_space<any>>
    %c2_i32_12 = arith.constant 2 : i32
    %c0_i32_13 = arith.constant 0 : i32
    %21 = tpu.memref_slice %arg3[%c2_i32_12, %c0_i32_13] : memref<16x32xf32, #tpu.memory_space<vmem>> -> memref<1x32xf32, #tpu.memory_space<vmem>>
    tpu.enqueue_dma source(%20 : memref<1x32xf32, #tpu.memory_space<any>>) target(%21 : memref<1x32xf32, #tpu.memory_space<vmem>>) target_semaphore(%arg4 : memref<!tpu.dma_semaphore, #tpu.memory_space<semaphore_mem>>)
    %c3_i32 = arith.constant 3 : i32
    %22 = arith.addi %0, %c3_i32 : i32
    %23 = arith.index_cast %22 : i32 to index
    %24 = memref.load %arg1[%23] : memref<16xi32, #tpu.memory_space<smem>>
    %c0_i32_14 = arith.constant 0 : i32
    %25 = arith.maxsi %24, %c0_i32_14 : i32
    %c49_i32_15 = arith.constant 49 : i32
    %26 = arith.minsi %25, %c49_i32_15 : i32
    %c0_i32_16 = arith.constant 0 : i32
    %27 = tpu.memref_slice %arg2[%26, %c0_i32_16] : memref<50x32xf32, #tpu.memory_space<any>> -> memref<1x32xf32, #tpu.memory_space<any>>
    %c3_i32_17 = arith.constant 3 : i32
    %c0_i32_18 = arith.constant 0 : i32
    %28 = tpu.memref_slice %arg3[%c3_i32_17, %c0_i32_18] : memref<16x32xf32, #tpu.memory_space<vmem>> -> memref<1x32xf32, #tpu.memory_space<vmem>>
    tpu.enqueue_dma source(%27 : memref<1x32xf32, #tpu.memory_space<any>>) target(%28 : memref<1x32xf32, #tpu.memory_space<vmem>>) target_semaphore(%arg4 : memref<!tpu.dma_semaphore, #tpu.memory_space<semaphore_mem>>)
    %c4_i32 = arith.constant 4 : i32
    %29 = arith.addi %0, %c4_i32 : i32
    %30 = arith.index_cast %29 : i32 to index
    %31 = memref.load %arg1[%30] : memref<16xi32, #tpu.memory_space<smem>>
    %c0_i32_19 = arith.constant 0 : i32
    %32 = arith.maxsi %31, %c0_i32_19 : i32
    %c49_i32_20 = arith.constant 49 : i32
    %33 = arith.minsi %32, %c49_i32_20 : i32
    %c0_i32_21 = arith.constant 0 : i32
    %34 = tpu.memref_slice %arg2[%33, %c0_i32_21] : memref<50x32xf32, #tpu.memory_space<any>> -> memref<1x32xf32, #tpu.memory_space<any>>
    %c4_i32_22 = arith.constant 4 : i32
    %c0_i32_23 = arith.constant 0 : i32
    %35 = tpu.memref_slice %arg3[%c4_i32_22, %c0_i32_23] : memref<16x32xf32, #tpu.memory_space<vmem>> -> memref<1x32xf32, #tpu.memory_space<vmem>>
    tpu.enqueue_dma source(%34 : memref<1x32xf32, #tpu.memory_space<any>>) target(%35 : memref<1x32xf32, #tpu.memory_space<vmem>>) target_semaphore(%arg4 : memref<!tpu.dma_semaphore, #tpu.memory_space<semaphore_mem>>)
    %c5_i32 = arith.constant 5 : i32
    %36 = arith.addi %0, %c5_i32 : i32
    %37 = arith.index_cast %36 : i32 to index
    %38 = memref.load %arg1[%37] : memref<16xi32, #tpu.memory_space<smem>>
    %c0_i32_24 = arith.constant 0 : i32
    %39 = arith.maxsi %38, %c0_i32_24 : i32
    %c49_i32_25 = arith.constant 49 : i32
    %40 = arith.minsi %39, %c49_i32_25 : i32
    %c0_i32_26 = arith.constant 0 : i32
    %41 = tpu.memref_slice %arg2[%40, %c0_i32_26] : memref<50x32xf32, #tpu.memory_space<any>> -> memref<1x32xf32, #tpu.memory_space<any>>
    %c5_i32_27 = arith.constant 5 : i32
    %c0_i32_28 = arith.constant 0 : i32
    %42 = tpu.memref_slice %arg3[%c5_i32_27, %c0_i32_28] : memref<16x32xf32, #tpu.memory_space<vmem>> -> memref<1x32xf32, #tpu.memory_space<vmem>>
    tpu.enqueue_dma source(%41 : memref<1x32xf32, #tpu.memory_space<any>>) target(%42 : memref<1x32xf32, #tpu.memory_space<vmem>>) target_semaphore(%arg4 : memref<!tpu.dma_semaphore, #tpu.memory_space<semaphore_mem>>)
    %c6_i32 = arith.constant 6 : i32
    %43 = arith.addi %0, %c6_i32 : i32
    %44 = arith.index_cast %43 : i32 to index
    %45 = memref.load %arg1[%44] : memref<16xi32, #tpu.memory_space<smem>>
    %c0_i32_29 = arith.constant 0 : i32
    %46 = arith.maxsi %45, %c0_i32_29 : i32
    %c49_i32_30 = arith.constant 49 : i32
    %47 = arith.minsi %46, %c49_i32_30 : i32
    %c0_i32_31 = arith.constant 0 : i32
    %48 = tpu.memref_slice %arg2[%47, %c0_i32_31] : memref<50x32xf32, #tpu.memory_space<any>> -> memref<1x32xf32, #tpu.memory_space<any>>
    %c6_i32_32 = arith.constant 6 : i32
    %c0_i32_33 = arith.constant 0 : i32
    %49 = tpu.memref_slice %arg3[%c6_i32_32, %c0_i32_33] : memref<16x32xf32, #tpu.memory_space<vmem>> -> memref<1x32xf32, #tpu.memory_space<vmem>>
    tpu.enqueue_dma source(%48 : memref<1x32xf32, #tpu.memory_space<any>>) target(%49 : memref<1x32xf32, #tpu.memory_space<vmem>>) target_semaphore(%arg4 : memref<!tpu.dma_semaphore, #tpu.memory_space<semaphore_mem>>)
    %c7_i32 = arith.constant 7 : i32
    %50 = arith.addi %0, %c7_i32 : i32
    %51 = arith.index_cast %50 : i32 to index
    %52 = memref.load %arg1[%51] : memref<16xi32, #tpu.memory_space<smem>>
    %c0_i32_34 = arith.constant 0 : i32
    %53 = arith.maxsi %52, %c0_i32_34 : i32
    %c49_i32_35 = arith.constant 49 : i32
    %54 = arith.minsi %53, %c49_i32_35 : i32
    %c0_i32_36 = arith.constant 0 : i32
    %55 = tpu.memref_slice %arg2[%54, %c0_i32_36] : memref<50x32xf32, #tpu.memory_space<any>> -> memref<1x32xf32, #tpu.memory_space<any>>
    %c7_i32_37 = arith.constant 7 : i32
    %c0_i32_38 = arith.constant 0 : i32
    %56 = tpu.memref_slice %arg3[%c7_i32_37, %c0_i32_38] : memref<16x32xf32, #tpu.memory_space<vmem>> -> memref<1x32xf32, #tpu.memory_space<vmem>>
    tpu.enqueue_dma source(%55 : memref<1x32xf32, #tpu.memory_space<any>>) target(%56 : memref<1x32xf32, #tpu.memory_space<vmem>>) target_semaphore(%arg4 : memref<!tpu.dma_semaphore, #tpu.memory_space<semaphore_mem>>)
    %c8_i32 = arith.constant 8 : i32
    %57 = arith.addi %0, %c8_i32 : i32
    %58 = arith.index_cast %57 : i32 to index
    %59 = memref.load %arg1[%58] : memref<16xi32, #tpu.memory_space<smem>>
    %c0_i32_39 = arith.constant 0 : i32
    %60 = arith.maxsi %59, %c0_i32_39 : i32
    %c49_i32_40 = arith.constant 49 : i32
    %61 = arith.minsi %60, %c49_i32_40 : i32
    %c0_i32_41 = arith.constant 0 : i32
    %62 = tpu.memref_slice %arg2[%61, %c0_i32_41] : memref<50x32xf32, #tpu.memory_space<any>> -> memref<1x32xf32, #tpu.memory_space<any>>
    %c8_i32_42 = arith.constant 8 : i32
    %c0_i32_43 = arith.constant 0 : i32
    %63 = tpu.memref_slice %arg3[%c8_i32_42, %c0_i32_43] : memref<16x32xf32, #tpu.memory_space<vmem>> -> memref<1x32xf32, #tpu.memory_space<vmem>>
    tpu.enqueue_dma source(%62 : memref<1x32xf32, #tpu.memory_space<any>>) target(%63 : memref<1x32xf32, #tpu.memory_space<vmem>>) target_semaphore(%arg4 : memref<!tpu.dma_semaphore, #tpu.memory_space<semaphore_mem>>)
    %c9_i32 = arith.constant 9 : i32
    %64 = arith.addi %0, %c9_i32 : i32
    %65 = arith.index_cast %64 : i32 to index
    %66 = memref.load %arg1[%65] : memref<16xi32, #tpu.memory_space<smem>>
    %c0_i32_44 = arith.constant 0 : i32
    %67 = arith.maxsi %66, %c0_i32_44 : i32
    %c49_i32_45 = arith.constant 49 : i32
    %68 = arith.minsi %67, %c49_i32_45 : i32
    %c0_i32_46 = arith.constant 0 : i32
    %69 = tpu.memref_slice %arg2[%68, %c0_i32_46] : memref<50x32xf32, #tpu.memory_space<any>> -> memref<1x32xf32, #tpu.memory_space<any>>
    %c9_i32_47 = arith.constant 9 : i32
    %c0_i32_48 = arith.constant 0 : i32
    %70 = tpu.memref_slice %arg3[%c9_i32_47, %c0_i32_48] : memref<16x32xf32, #tpu.memory_space<vmem>> -> memref<1x32xf32, #tpu.memory_space<vmem>>
    tpu.enqueue_dma source(%69 : memref<1x32xf32, #tpu.memory_space<any>>) target(%70 : memref<1x32xf32, #tpu.memory_space<vmem>>) target_semaphore(%arg4 : memref<!tpu.dma_semaphore, #tpu.memory_space<semaphore_mem>>)
    %c10_i32 = arith.constant 10 : i32
    %71 = arith.addi %0, %c10_i32 : i32
    %72 = arith.index_cast %71 : i32 to index
    %73 = memref.load %arg1[%72] : memref<16xi32, #tpu.memory_space<smem>>
    %c0_i32_49 = arith.constant 0 : i32
    %74 = arith.maxsi %73, %c0_i32_49 : i32
    %c49_i32_50 = arith.constant 49 : i32
    %75 = arith.minsi %74, %c49_i32_50 : i32
    %c0_i32_51 = arith.constant 0 : i32
    %76 = tpu.memref_slice %arg2[%75, %c0_i32_51] : memref<50x32xf32, #tpu.memory_space<any>> -> memref<1x32xf32, #tpu.memory_space<any>>
    %c10_i32_52 = arith.constant 10 : i32
    %c0_i32_53 = arith.constant 0 : i32
    %77 = tpu.memref_slice %arg3[%c10_i32_52, %c0_i32_53] : memref<16x32xf32, #tpu.memory_space<vmem>> -> memref<1x32xf32, #tpu.memory_space<vmem>>
    tpu.enqueue_dma source(%76 : memref<1x32xf32, #tpu.memory_space<any>>) target(%77 : memref<1x32xf32, #tpu.memory_space<vmem>>) target_semaphore(%arg4 : memref<!tpu.dma_semaphore, #tpu.memory_space<semaphore_mem>>)
    %c11_i32 = arith.constant 11 : i32
    %78 = arith.addi %0, %c11_i32 : i32
    %79 = arith.index_cast %78 : i32 to index
    %80 = memref.load %arg1[%79] : memref<16xi32, #tpu.memory_space<smem>>
    %c0_i32_54 = arith.constant 0 : i32
    %81 = arith.maxsi %80, %c0_i32_54 : i32
    %c49_i32_55 = arith.constant 49 : i32
    %82 = arith.minsi %81, %c49_i32_55 : i32
    %c0_i32_56 = arith.constant 0 : i32
    %83 = tpu.memref_slice %arg2[%82, %c0_i32_56] : memref<50x32xf32, #tpu.memory_space<any>> -> memref<1x32xf32, #tpu.memory_space<any>>
    %c11_i32_57 = arith.constant 11 : i32
    %c0_i32_58 = arith.constant 0 : i32
    %84 = tpu.memref_slice %arg3[%c11_i32_57, %c0_i32_58] : memref<16x32xf32, #tpu.memory_space<vmem>> -> memref<1x32xf32, #tpu.memory_space<vmem>>
    tpu.enqueue_dma source(%83 : memref<1x32xf32, #tpu.memory_space<any>>) target(%84 : memref<1x32xf32, #tpu.memory_space<vmem>>) target_semaphore(%arg4 : memref<!tpu.dma_semaphore, #tpu.memory_space<semaphore_mem>>)
    %c12_i32 = arith.constant 12 : i32
    %85 = arith.addi %0, %c12_i32 : i32
    %86 = arith.index_cast %85 : i32 to index
    %87 = memref.load %arg1[%86] : memref<16xi32, #tpu.memory_space<smem>>
    %c0_i32_59 = arith.constant 0 : i32
    %88 = arith.maxsi %87, %c0_i32_59 : i32
    %c49_i32_60 = arith.constant 49 : i32
    %89 = arith.minsi %88, %c49_i32_60 : i32
    %c0_i32_61 = arith.constant 0 : i32
    %90 = tpu.memref_slice %arg2[%89, %c0_i32_61] : memref<50x32xf32, #tpu.memory_space<any>> -> memref<1x32xf32, #tpu.memory_space<any>>
    %c12_i32_62 = arith.constant 12 : i32
    %c0_i32_63 = arith.constant 0 : i32
    %91 = tpu.memref_slice %arg3[%c12_i32_62, %c0_i32_63] : memref<16x32xf32, #tpu.memory_space<vmem>> -> memref<1x32xf32, #tpu.memory_space<vmem>>
    tpu.enqueue_dma source(%90 : memref<1x32xf32, #tpu.memory_space<any>>) target(%91 : memref<1x32xf32, #tpu.memory_space<vmem>>) target_semaphore(%arg4 : memref<!tpu.dma_semaphore, #tpu.memory_space<semaphore_mem>>)
    %c13_i32 = arith.constant 13 : i32
    %92 = arith.addi %0, %c13_i32 : i32
    %93 = arith.index_cast %92 : i32 to index
    %94 = memref.load %arg1[%93] : memref<16xi32, #tpu.memory_space<smem>>
    %c0_i32_64 = arith.constant 0 : i32
    %95 = arith.maxsi %94, %c0_i32_64 : i32
    %c49_i32_65 = arith.constant 49 : i32
    %96 = arith.minsi %95, %c49_i32_65 : i32
    %c0_i32_66 = arith.constant 0 : i32
    %97 = tpu.memref_slice %arg2[%96, %c0_i32_66] : memref<50x32xf32, #tpu.memory_space<any>> -> memref<1x32xf32, #tpu.memory_space<any>>
    %c13_i32_67 = arith.constant 13 : i32
    %c0_i32_68 = arith.constant 0 : i32
    %98 = tpu.memref_slice %arg3[%c13_i32_67, %c0_i32_68] : memref<16x32xf32, #tpu.memory_space<vmem>> -> memref<1x32xf32, #tpu.memory_space<vmem>>
    tpu.enqueue_dma source(%97 : memref<1x32xf32, #tpu.memory_space<any>>) target(%98 : memref<1x32xf32, #tpu.memory_space<vmem>>) target_semaphore(%arg4 : memref<!tpu.dma_semaphore, #tpu.memory_space<semaphore_mem>>)
    %c14_i32 = arith.constant 14 : i32
    %99 = arith.addi %0, %c14_i32 : i32
    %100 = arith.index_cast %99 : i32 to index
    %101 = memref.load %arg1[%100] : memref<16xi32, #tpu.memory_space<smem>>
    %c0_i32_69 = arith.constant 0 : i32
    %102 = arith.maxsi %101, %c0_i32_69 : i32
    %c49_i32_70 = arith.constant 49 : i32
    %103 = arith.minsi %102, %c49_i32_70 : i32
    %c0_i32_71 = arith.constant 0 : i32
    %104 = tpu.memref_slice %arg2[%103, %c0_i32_71] : memref<50x32xf32, #tpu.memory_space<any>> -> memref<1x32xf32, #tpu.memory_space<any>>
    %c14_i32_72 = arith.constant 14 : i32
    %c0_i32_73 = arith.constant 0 : i32
    %105 = tpu.memref_slice %arg3[%c14_i32_72, %c0_i32_73] : memref<16x32xf32, #tpu.memory_space<vmem>> -> memref<1x32xf32, #tpu.memory_space<vmem>>
    tpu.enqueue_dma source(%104 : memref<1x32xf32, #tpu.memory_space<any>>) target(%105 : memref<1x32xf32, #tpu.memory_space<vmem>>) target_semaphore(%arg4 : memref<!tpu.dma_semaphore, #tpu.memory_space<semaphore_mem>>)
    %c15_i32 = arith.constant 15 : i32
    %106 = arith.addi %0, %c15_i32 : i32
    %107 = arith.index_cast %106 : i32 to index
    %108 = memref.load %arg1[%107] : memref<16xi32, #tpu.memory_space<smem>>
    %c0_i32_74 = arith.constant 0 : i32
    %109 = arith.maxsi %108, %c0_i32_74 : i32
    %c49_i32_75 = arith.constant 49 : i32
    %110 = arith.minsi %109, %c49_i32_75 : i32
    %c0_i32_76 = arith.constant 0 : i32
    %111 = tpu.memref_slice %arg2[%110, %c0_i32_76] : memref<50x32xf32, #tpu.memory_space<any>> -> memref<1x32xf32, #tpu.memory_space<any>>
    %c15_i32_77 = arith.constant 15 : i32
    %c0_i32_78 = arith.constant 0 : i32
    %112 = tpu.memref_slice %arg3[%c15_i32_77, %c0_i32_78] : memref<16x32xf32, #tpu.memory_space<vmem>> -> memref<1x32xf32, #tpu.memory_space<vmem>>
    tpu.enqueue_dma source(%111 : memref<1x32xf32, #tpu.memory_space<any>>) target(%112 : memref<1x32xf32, #tpu.memory_space<vmem>>) target_semaphore(%arg4 : memref<!tpu.dma_semaphore, #tpu.memory_space<semaphore_mem>>)
    tpu.wait_dma2 semaphore(%arg4 : memref<!tpu.dma_semaphore, #tpu.memory_space<semaphore_mem>>) src(%arg3 : memref<16x32xf32, #tpu.memory_space<vmem>>) dst(%arg3 : memref<16x32xf32, #tpu.memory_space<vmem>>)
    %c0 = arith.constant 0 : index
    %c0_79 = arith.constant 0 : index
    %113 = vector.load %arg3[%c0, %c0_79] : memref<16x32xf32, #tpu.memory_space<vmem>>, vector<16x32xf32>
    %cst = arith.constant 5.65685415 : f32
    %114 = vector.broadcast %cst : f32 to vector<16x32xf32>
    %115 = arith.mulf %113, %114 : vector<16x32xf32>
    %c0_80 = arith.constant 0 : index
    %c0_81 = arith.constant 0 : index
    %116 = vector.load %arg3[%c0_80, %c0_81] : memref<16x32xf32, #tpu.memory_space<vmem>>, vector<16x32xf32>
    tpu.vector_store %arg3[%c0_80, %c0_81], %115 {strides = array<i32>} : memref<16x32xf32, #tpu.memory_space<vmem>>, vector<16x32xf32>,
    return
  }
  func.func @transform_1(%arg0: i32, %arg1: memref<16xi32, #tpu.memory_space<smem>>) -> (i32, i32) {
    %c0_i32 = arith.constant 0 : i32
    %c0_i32_0 = arith.constant 0 : i32
    return %arg0, %c0_i32 : i32, i32
  }
}

</mosaic_0001>

<llo_original>
// kernel: embeddings_forward.1
$region0: #{embeddings_forward.1}
  #allocation0 [shape = 'u32[]', space=smem, size = 0x4, offset = 0x4, fixed_abs, tag = 'smem constant byte address 0x4 - core index']
  #allocation1 [shape = 'u32[144,128]{1,0:T(1,128)}', space=vmem, size = 0x12000, scoped, tag = 'internal scratch']
  #allocation2 [shape = 's32[1]{0}', space=sflag, size = 0x4, scoped, tag = 'scratch operand']
  #allocation3 [shape = 's32[1]{0}', space=sflag, size = 0x4, scoped, tag = 'scoped memory for embeddings_forward.1']
  #allocation4 [shape = 'u8[512]{0}', space=smem, size = 0x200, scoped, tag = 'prefetched SMEM operand 0']
  #allocation7 [shape = 's32[]', space=sflag, size = 0x4, offset = 0, fixed_abs, tag = 'sflag constant byte address 0x0 - dummy sync flag']
  #allocation8 [shape = 's32[]', space=sflag, size = 0x4, offset = 0, fixed_abs, tag = 'sflag constant byte address 0x0 - dummy sync flag']
  #allocation9 [shape = 's32[]', space=sflag, size = 0x4, offset = 0, fixed_abs, tag = 'sflag constant byte address 0x0 - dummy sync flag']
  #allocation10 [shape = 's32[]', space=sflag, size = 0x4, offset = 0, fixed_abs, tag = 'sflag constant byte address 0x0 - dummy sync flag']
  #allocation11 [shape = 's32[]', space=sflag, size = 0x4, offset = 0, fixed_abs, tag = 'sflag constant byte address 0x0 - dummy sync flag']
  #allocation12 [shape = 's32[]', space=sflag, size = 0x4, offset = 0, fixed_abs, tag = 'sflag constant byte address 0x0 - dummy sync flag']
  #allocation13 [shape = 's32[]', space=sflag, size = 0x4, offset = 0, fixed_abs, tag = 'sflag constant byte address 0x0 - dummy sync flag']
  #allocation14 [shape = 's32[]', space=sflag, size = 0x4, offset = 0, fixed_abs, tag = 'sflag constant byte address 0x0 - dummy sync flag']
  #allocation15 [shape = 's32[]', space=sflag, size = 0x4, offset = 0, fixed_abs, tag = 'sflag constant byte address 0x0 - dummy sync flag']
  #allocation16 [shape = 's32[]', space=sflag, size = 0x4, offset = 0, fixed_abs, tag = 'sflag constant byte address 0x0 - dummy sync flag']
  #allocation17 [shape = 's32[]', space=sflag, size = 0x4, offset = 0, fixed_abs, tag = 'sflag constant byte address 0x0 - dummy sync flag']
  #allocation18 [shape = 's32[]', space=sflag, size = 0x4, offset = 0, fixed_abs, tag = 'sflag constant byte address 0x0 - dummy sync flag']
  #allocation19 [shape = 's32[]', space=sflag, size = 0x4, offset = 0, fixed_abs, tag = 'sflag constant byte address 0x0 - dummy sync flag']
  #allocation20 [shape = 's32[]', space=sflag, size = 0x4, offset = 0, fixed_abs, tag = 'sflag constant byte address 0x0 - dummy sync flag']
  #allocation21 [shape = 's32[]', space=sflag, size = 0x4, offset = 0, fixed_abs, tag = 'sflag constant byte address 0x0 - dummy sync flag']
  #allocation22 [shape = 's32[]', space=sflag, size = 0x4, offset = 0, fixed_abs, tag = 'sflag constant byte address 0x0 - dummy sync flag']
  %s0 = inlined_call_operand.vmem [shape: s32[16], index: 0, kind: input, shape index: {}]
  %s1 = inlined_call_operand.vmem [shape: f32[50,32], index: 1, kind: input, shape index: {}]
  %s2 = inlined_call_operand.hbm [shape: f32[16,32], index: 2, kind: output, shape index: {}]
  %s3 = sld [smem:[#allocation0]]
  $region490: #{embeddings_forward.1} parent=0
    _
  %s5 = ssub.s32 1, %s3
  %s6 = scalar_select 0, %s5, %s3
  %s7 = sshll.u32 %s0, 4
  %s8 = int_to_ptr.vmem [resolvable:$true] %s7
  %10 = dma.vmem_to_smem %s8, 16, [#allocation4], [#allocation3]
  %11 = dma.done [#allocation3], 16
  %12 = sfence
  $region1: #{embeddings_forward.1} parent=0
    #allocation5 [shape = 'u8[8192]{0}', space=vmem, size = 0x2000, scoped, tag = 'output window, operand 0, single buffered']
    #allocation6 [shape = 's32[1]{0}', space=sflag, size = 0x4, scoped, tag = 'scoped memory for embeddings_forward.1']
    %13 = vsyncpa [#allocation6], 0
    %s14 = smul.u32 0, 16
    %s15 = sld [smem:[#allocation4 + %s14]]
    %p16 = scmp.gt.s32.totalorder %s15, 0
    %s17 = scalar_select %p16, %s15, 0
    %p18 = scmp.lt.s32.totalorder %s17, 49
    %s19 = scalar_select %p18, %s17, 49
    %s20 = scalar_lea.vmem %s1, %s19
    %p22 = scmp.lt.u32.totalorder 1, 8
    %p23 = pneg %p22
    // Predicated region
    $region2: #{embeddings_forward.1} parent=1 // pred_check
      _
    $region3: #{embeddings_forward.1} parent=1 // pred_check_branch
      %25 = sbr.rel (%p22) target = $region5
    $region4: #{embeddings_forward.1} parent=1 // pred_region
      %s41 = sand.u32 1, 7
      %p42 = scmp.eq.s32.totalorder %s41, 0
      %p43 = pneg %p42
      // Predicated region
      $region17: #{embeddings_forward.1} parent=4 // pred_check
        _
      $region18: #{embeddings_forward.1} parent=4 // pred_check_branch
        %45 = sbr.rel (%p42) target = $region20
      $region19: #{embeddings_forward.1} parent=4 // pred_region
        %s46 = sand.u32 1, 7
        %s47 = ssub.s32 1, %s46
        %s48 = scalar_lea.vmem %s20, %s47
        %s49 = ssub.s32 1, %s46
        %s50 = scalar_lea.vmem [#allocation5], %s49
        %s51 = sshll.u32 1, %s46
        %s52 = ssub.s32 %s51, 1
        loop: start=0, step=1, limit=1
        $region21: #{embeddings_forward.1} parent=19 // loop_pre_header
          _
        $region22: #{embeddings_forward.1} parent=19 // loop_header
          %s54 = sphi 0, %s58
          %p55 = scmp.ge.s32.totalorder %s54, 1
          %s59 = sphi %s48, %s48
          %s60 = sphi %s50, %s50
        $region23: #{embeddings_forward.1} parent=19 // loop_header_branch
          %57 = sbr.rel (%p55) target = $region27
        $region24: #{embeddings_forward.1} parent=19 // loop_body
          %v61 = vld [vmem:[%s59] sm:%s52]
          %62 = vst [vmem:[%s60] sm:%s52] %v61
        $region25: #{embeddings_forward.1} parent=19 // loop_footer
          %s58 = sadd.s32 1, %s54
        $region26: #{embeddings_forward.1} parent=19 // loop_footer_branch
          %53 = sbr.rel target = $region22
        $region27: #{embeddings_forward.1} parent=19 // loop_exit
          _
      $region20: #{embeddings_forward.1} parent=4 // pred_fallthru
        _
    $region5: #{embeddings_forward.1} parent=1 // pred_fallthru
      _
    // Predicated region
    $region6: #{embeddings_forward.1} parent=1 // pred_check
      %p26 = pneg %p22
    $region7: #{embeddings_forward.1} parent=1 // pred_check_branch
      %28 = sbr.rel (%p26) target = $region9
    $region8: #{embeddings_forward.1} parent=1 // pred_region
      %s29 = sshll.u32 1, 1
      %s30 = ssub.s32 %s29, 1
      loop: start=0, step=1, limit=1
      $region10: #{embeddings_forward.1} parent=8 // loop_pre_header
        _
      $region11: #{embeddings_forward.1} parent=8 // loop_header
        %s32 = sphi 0, %s36
        %p33 = scmp.ge.s32.totalorder %s32, 1
        %s37 = sphi %s20, %s20
        %s38 = sphi [#allocation5], [#allocation5]
      $region12: #{embeddings_forward.1} parent=8 // loop_header_branch
        %35 = sbr.rel (%p33) target = $region16
      $region13: #{embeddings_forward.1} parent=8 // loop_body
        %v39 = vld [vmem:[%s37] sm:%s30]
        %40 = vst [vmem:[%s38] sm:%s30] %v39
      $region14: #{embeddings_forward.1} parent=8 // loop_footer
        %s36 = sadd.s32 1, %s32
      $region15: #{embeddings_forward.1} parent=8 // loop_footer_branch
        %31 = sbr.rel target = $region11
      $region16: #{embeddings_forward.1} parent=8 // loop_exit
        _
    $region9: #{embeddings_forward.1} parent=1 // pred_fallthru
      _
    // Predicated region
    $region28: #{embeddings_forward.1} parent=1 // pred_check
      _
    $region29: #{embeddings_forward.1} parent=1 // pred_check_branch
      %65 = sbr.rel (0) target = $region31
    $region30: #{embeddings_forward.1} parent=1 // pred_region
      %66 = vsyncadd [#allocation2], 16
    $region31: #{embeddings_forward.1} parent=1 // pred_fallthru
      _
    %s67 = sadd.s32 %s14, 1
    %s68 = sld [smem:[#allocation4 + %s67]]
    %p69 = scmp.gt.s32.totalorder %s68, 0
    %s70 = scalar_select %p69, %s68, 0
    %p71 = scmp.lt.s32.totalorder %s70, 49
    %s72 = scalar_select %p71, %s70, 49
    %s73 = scalar_lea.vmem %s1, %s72
    %s74 = scalar_lea.vmem [#allocation5], 1
    %p76 = scmp.lt.u32.totalorder 1, 8
    %p77 = pneg %p76
    // Predicated region
    $region32: #{embeddings_forward.1} parent=1 // pred_check
      _
    $region33: #{embeddings_forward.1} parent=1 // pred_check_branch
      %79 = sbr.rel (%p76) target = $region35
    $region34: #{embeddings_forward.1} parent=1 // pred_region
      %s95 = sand.u32 1, 7
      %p96 = scmp.eq.s32.totalorder %s95, 0
      %p97 = pneg %p96
      // Predicated region
      $region47: #{embeddings_forward.1} parent=34 // pred_check
        _
      $region48: #{embeddings_forward.1} parent=34 // pred_check_branch
        %99 = sbr.rel (%p96) target = $region50
      $region49: #{embeddings_forward.1} parent=34 // pred_region
        %s100 = sand.u32 1, 7
        %s101 = ssub.s32 1, %s100
        %s102 = scalar_lea.vmem %s73, %s101
        %s103 = ssub.s32 1, %s100
        %s104 = scalar_lea.vmem %s74, %s103 [#allocation5]
        %s105 = sshll.u32 1, %s100
        %s106 = ssub.s32 %s105, 1
        loop: start=0, step=1, limit=1
        $region51: #{embeddings_forward.1} parent=49 // loop_pre_header
          _
        $region52: #{embeddings_forward.1} parent=49 // loop_header
          %s108 = sphi 0, %s112
          %p109 = scmp.ge.s32.totalorder %s108, 1
          %s113 = sphi %s102, %s102
          %s114 = sphi %s104, %s104
        $region53: #{embeddings_forward.1} parent=49 // loop_header_branch
          %111 = sbr.rel (%p109) target = $region57
        $region54: #{embeddings_forward.1} parent=49 // loop_body
          %v115 = vld [vmem:[%s113] sm:%s106]
          %116 = vst [vmem:[%s114] sm:%s106] %v115
        $region55: #{embeddings_forward.1} parent=49 // loop_footer
          %s112 = sadd.s32 1, %s108
        $region56: #{embeddings_forward.1} parent=49 // loop_footer_branch
          %107 = sbr.rel target = $region52
        $region57: #{embeddings_forward.1} parent=49 // loop_exit
          _
      $region50: #{embeddings_forward.1} parent=34 // pred_fallthru
        _
    $region35: #{embeddings_forward.1} parent=1 // pred_fallthru
      _
    // Predicated region
    $region36: #{embeddings_forward.1} parent=1 // pred_check
      %p80 = pneg %p76
    $region37: #{embeddings_forward.1} parent=1 // pred_check_branch
      %82 = sbr.rel (%p80) target = $region39
    $region38: #{embeddings_forward.1} parent=1 // pred_region
      %s83 = sshll.u32 1, 1
      %s84 = ssub.s32 %s83, 1
      loop: start=0, step=1, limit=1
      $region40: #{embeddings_forward.1} parent=38 // loop_pre_header
        _
      $region41: #{embeddings_forward.1} parent=38 // loop_header
        %s86 = sphi 0, %s90
        %p87 = scmp.ge.s32.totalorder %s86, 1
        %s91 = sphi %s73, %s73
        %s92 = sphi %s74, %s74
      $region42: #{embeddings_forward.1} parent=38 // loop_header_branch
        %89 = sbr.rel (%p87) target = $region46
      $region43: #{embeddings_forward.1} parent=38 // loop_body
        %v93 = vld [vmem:[%s91] sm:%s84]
        %94 = vst [vmem:[%s92] sm:%s84] %v93
      $region44: #{embeddings_forward.1} parent=38 // loop_footer
        %s90 = sadd.s32 1, %s86
      $region45: #{embeddings_forward.1} parent=38 // loop_footer_branch
        %85 = sbr.rel target = $region41
      $region46: #{embeddings_forward.1} parent=38 // loop_exit
        _
    $region39: #{embeddings_forward.1} parent=1 // pred_fallthru
      _
    // Predicated region
    $region58: #{embeddings_forward.1} parent=1 // pred_check
      _
    $region59: #{embeddings_forward.1} parent=1 // pred_check_branch
      %119 = sbr.rel (0) target = $region61
    $region60: #{embeddings_forward.1} parent=1 // pred_region
      %120 = vsyncadd [#allocation2], 16
    $region61: #{embeddings_forward.1} parent=1 // pred_fallthru
      _
    %s121 = sadd.s32 %s14, 2
    %s122 = sld [smem:[#allocation4 + %s121]]
    %p123 = scmp.gt.s32.totalorder %s122, 0
    %s124 = scalar_select %p123, %s122, 0
    %p125 = scmp.lt.s32.totalorder %s124, 49
    %s126 = scalar_select %p125, %s124, 49
    %s127 = scalar_lea.vmem %s1, %s126
    %s128 = scalar_lea.vmem [#allocation5], 2
    %p130 = scmp.lt.u32.totalorder 1, 8
    %p131 = pneg %p130
    // Predicated region
    $region62: #{embeddings_forward.1} parent=1 // pred_check
      _
    $region63: #{embeddings_forward.1} parent=1 // pred_check_branch
      %133 = sbr.rel (%p130) target = $region65
    $region64: #{embeddings_forward.1} parent=1 // pred_region
      %s149 = sand.u32 1, 7
      %p150 = scmp.eq.s32.totalorder %s149, 0
      %p151 = pneg %p150
      // Predicated region
      $region77: #{embeddings_forward.1} parent=64 // pred_check
        _
      $region78: #{embeddings_forward.1} parent=64 // pred_check_branch
        %153 = sbr.rel (%p150) target = $region80
      $region79: #{embeddings_forward.1} parent=64 // pred_region
        %s154 = sand.u32 1, 7
        %s155 = ssub.s32 1, %s154
        %s156 = scalar_lea.vmem %s127, %s155
        %s157 = ssub.s32 1, %s154
        %s158 = scalar_lea.vmem %s128, %s157 [#allocation5]
        %s159 = sshll.u32 1, %s154
        %s160 = ssub.s32 %s159, 1
        loop: start=0, step=1, limit=1
        $region81: #{embeddings_forward.1} parent=79 // loop_pre_header
          _
        $region82: #{embeddings_forward.1} parent=79 // loop_header
          %s162 = sphi 0, %s166
          %p163 = scmp.ge.s32.totalorder %s162, 1
          %s167 = sphi %s156, %s156
          %s168 = sphi %s158, %s158
        $region83: #{embeddings_forward.1} parent=79 // loop_header_branch
          %165 = sbr.rel (%p163) target = $region87
        $region84: #{embeddings_forward.1} parent=79 // loop_body
          %v169 = vld [vmem:[%s167] sm:%s160]
          %170 = vst [vmem:[%s168] sm:%s160] %v169
        $region85: #{embeddings_forward.1} parent=79 // loop_footer
          %s166 = sadd.s32 1, %s162
        $region86: #{embeddings_forward.1} parent=79 // loop_footer_branch
          %161 = sbr.rel target = $region82
        $region87: #{embeddings_forward.1} parent=79 // loop_exit
          _
      $region80: #{embeddings_forward.1} parent=64 // pred_fallthru
        _
    $region65: #{embeddings_forward.1} parent=1 // pred_fallthru
      _
    // Predicated region
    $region66: #{embeddings_forward.1} parent=1 // pred_check
      %p134 = pneg %p130
    $region67: #{embeddings_forward.1} parent=1 // pred_check_branch
      %136 = sbr.rel (%p134) target = $region69
    $region68: #{embeddings_forward.1} parent=1 // pred_region
      %s137 = sshll.u32 1, 1
      %s138 = ssub.s32 %s137, 1
      loop: start=0, step=1, limit=1
      $region70: #{embeddings_forward.1} parent=68 // loop_pre_header
        _
      $region71: #{embeddings_forward.1} parent=68 // loop_header
        %s140 = sphi 0, %s144
        %p141 = scmp.ge.s32.totalorder %s140, 1
        %s145 = sphi %s127, %s127
        %s146 = sphi %s128, %s128
      $region72: #{embeddings_forward.1} parent=68 // loop_header_branch
        %143 = sbr.rel (%p141) target = $region76
      $region73: #{embeddings_forward.1} parent=68 // loop_body
        %v147 = vld [vmem:[%s145] sm:%s138]
        %148 = vst [vmem:[%s146] sm:%s138] %v147
      $region74: #{embeddings_forward.1} parent=68 // loop_footer
        %s144 = sadd.s32 1, %s140
      $region75: #{embeddings_forward.1} parent=68 // loop_footer_branch
        %139 = sbr.rel target = $region71
      $region76: #{embeddings_forward.1} parent=68 // loop_exit
        _
    $region69: #{embeddings_forward.1} parent=1 // pred_fallthru
      _
    // Predicated region
    $region88: #{embeddings_forward.1} parent=1 // pred_check
      _
    $region89: #{embeddings_forward.1} parent=1 // pred_check_branch
      %173 = sbr.rel (0) target = $region91
    $region90: #{embeddings_forward.1} parent=1 // pred_region
      %174 = vsyncadd [#allocation2], 16
    $region91: #{embeddings_forward.1} parent=1 // pred_fallthru
      _
    %s175 = sadd.s32 %s14, 3
    %s176 = sld [smem:[#allocation4 + %s175]]
    %p177 = scmp.gt.s32.totalorder %s176, 0
    %s178 = scalar_select %p177, %s176, 0
    %p179 = scmp.lt.s32.totalorder %s178, 49
    %s180 = scalar_select %p179, %s178, 49
    %s181 = scalar_lea.vmem %s1, %s180
    %s182 = scalar_lea.vmem [#allocation5], 3
    %p184 = scmp.lt.u32.totalorder 1, 8
    %p185 = pneg %p184
    // Predicated region
    $region92: #{embeddings_forward.1} parent=1 // pred_check
      _
    $region93: #{embeddings_forward.1} parent=1 // pred_check_branch
      %187 = sbr.rel (%p184) target = $region95
    $region94: #{embeddings_forward.1} parent=1 // pred_region
      %s203 = sand.u32 1, 7
      %p204 = scmp.eq.s32.totalorder %s203, 0
      %p205 = pneg %p204
      // Predicated region
      $region107: #{embeddings_forward.1} parent=94 // pred_check
        _
      $region108: #{embeddings_forward.1} parent=94 // pred_check_branch
        %207 = sbr.rel (%p204) target = $region110
      $region109: #{embeddings_forward.1} parent=94 // pred_region
        %s208 = sand.u32 1, 7
        %s209 = ssub.s32 1, %s208
        %s210 = scalar_lea.vmem %s181, %s209
        %s211 = ssub.s32 1, %s208
        %s212 = scalar_lea.vmem %s182, %s211 [#allocation5]
        %s213 = sshll.u32 1, %s208
        %s214 = ssub.s32 %s213, 1
        loop: start=0, step=1, limit=1
        $region111: #{embeddings_forward.1} parent=109 // loop_pre_header
          _
        $region112: #{embeddings_forward.1} parent=109 // loop_header
          %s216 = sphi 0, %s220
          %p217 = scmp.ge.s32.totalorder %s216, 1
          %s221 = sphi %s210, %s210
          %s222 = sphi %s212, %s212
        $region113: #{embeddings_forward.1} parent=109 // loop_header_branch
          %219 = sbr.rel (%p217) target = $region117
        $region114: #{embeddings_forward.1} parent=109 // loop_body
          %v223 = vld [vmem:[%s221] sm:%s214]
          %224 = vst [vmem:[%s222] sm:%s214] %v223
        $region115: #{embeddings_forward.1} parent=109 // loop_footer
          %s220 = sadd.s32 1, %s216
        $region116: #{embeddings_forward.1} parent=109 // loop_footer_branch
          %215 = sbr.rel target = $region112
        $region117: #{embeddings_forward.1} parent=109 // loop_exit
          _
      $region110: #{embeddings_forward.1} parent=94 // pred_fallthru
        _
    $region95: #{embeddings_forward.1} parent=1 // pred_fallthru
      _
    // Predicated region
    $region96: #{embeddings_forward.1} parent=1 // pred_check
      %p188 = pneg %p184
    $region97: #{embeddings_forward.1} parent=1 // pred_check_branch
      %190 = sbr.rel (%p188) target = $region99
    $region98: #{embeddings_forward.1} parent=1 // pred_region
      %s191 = sshll.u32 1, 1
      %s192 = ssub.s32 %s191, 1
      loop: start=0, step=1, limit=1
      $region100: #{embeddings_forward.1} parent=98 // loop_pre_header
        _
      $region101: #{embeddings_forward.1} parent=98 // loop_header
        %s194 = sphi 0, %s198
        %p195 = scmp.ge.s32.totalorder %s194, 1
        %s199 = sphi %s181, %s181
        %s200 = sphi %s182, %s182
      $region102: #{embeddings_forward.1} parent=98 // loop_header_branch
        %197 = sbr.rel (%p195) target = $region106
      $region103: #{embeddings_forward.1} parent=98 // loop_body
        %v201 = vld [vmem:[%s199] sm:%s192]
        %202 = vst [vmem:[%s200] sm:%s192] %v201
      $region104: #{embeddings_forward.1} parent=98 // loop_footer
        %s198 = sadd.s32 1, %s194
      $region105: #{embeddings_forward.1} parent=98 // loop_footer_branch
        %193 = sbr.rel target = $region101
      $region106: #{embeddings_forward.1} parent=98 // loop_exit
        _
    $region99: #{embeddings_forward.1} parent=1 // pred_fallthru
      _
    // Predicated region
    $region118: #{embeddings_forward.1} parent=1 // pred_check
      _
    $region119: #{embeddings_forward.1} parent=1 // pred_check_branch
      %227 = sbr.rel (0) target = $region121
    $region120: #{embeddings_forward.1} parent=1 // pred_region
      %228 = vsyncadd [#allocation2], 16
    $region121: #{embeddings_forward.1} parent=1 // pred_fallthru
      _
    %s229 = sadd.s32 %s14, 4
    %s230 = sld [smem:[#allocation4 + %s229]]
    %p231 = scmp.gt.s32.totalorder %s230, 0
    %s232 = scalar_select %p231, %s230, 0
    %p233 = scmp.lt.s32.totalorder %s232, 49
    %s234 = scalar_select %p233, %s232, 49
    %s235 = scalar_lea.vmem %s1, %s234
    %s236 = scalar_lea.vmem [#allocation5], 4
    %p238 = scmp.lt.u32.totalorder 1, 8
    %p239 = pneg %p238
    // Predicated region
    $region122: #{embeddings_forward.1} parent=1 // pred_check
      _
    $region123: #{embeddings_forward.1} parent=1 // pred_check_branch
      %241 = sbr.rel (%p238) target = $region125
    $region124: #{embeddings_forward.1} parent=1 // pred_region
      %s257 = sand.u32 1, 7
      %p258 = scmp.eq.s32.totalorder %s257, 0
      %p259 = pneg %p258
      // Predicated region
      $region137: #{embeddings_forward.1} parent=124 // pred_check
        _
      $region138: #{embeddings_forward.1} parent=124 // pred_check_branch
        %261 = sbr.rel (%p258) target = $region140
      $region139: #{embeddings_forward.1} parent=124 // pred_region
        %s262 = sand.u32 1, 7
        %s263 = ssub.s32 1, %s262
        %s264 = scalar_lea.vmem %s235, %s263
        %s265 = ssub.s32 1, %s262
        %s266 = scalar_lea.vmem %s236, %s265 [#allocation5]
        %s267 = sshll.u32 1, %s262
        %s268 = ssub.s32 %s267, 1
        loop: start=0, step=1, limit=1
        $region141: #{embeddings_forward.1} parent=139 // loop_pre_header
          _
        $region142: #{embeddings_forward.1} parent=139 // loop_header
          %s270 = sphi 0, %s274
          %p271 = scmp.ge.s32.totalorder %s270, 1
          %s275 = sphi %s264, %s264
          %s276 = sphi %s266, %s266
        $region143: #{embeddings_forward.1} parent=139 // loop_header_branch
          %273 = sbr.rel (%p271) target = $region147
        $region144: #{embeddings_forward.1} parent=139 // loop_body
          %v277 = vld [vmem:[%s275] sm:%s268]
          %278 = vst [vmem:[%s276] sm:%s268] %v277
        $region145: #{embeddings_forward.1} parent=139 // loop_footer
          %s274 = sadd.s32 1, %s270
        $region146: #{embeddings_forward.1} parent=139 // loop_footer_branch
          %269 = sbr.rel target = $region142
        $region147: #{embeddings_forward.1} parent=139 // loop_exit
          _
      $region140: #{embeddings_forward.1} parent=124 // pred_fallthru
        _
    $region125: #{embeddings_forward.1} parent=1 // pred_fallthru
      _
    // Predicated region
    $region126: #{embeddings_forward.1} parent=1 // pred_check
      %p242 = pneg %p238
    $region127: #{embeddings_forward.1} parent=1 // pred_check_branch
      %244 = sbr.rel (%p242) target = $region129
    $region128: #{embeddings_forward.1} parent=1 // pred_region
      %s245 = sshll.u32 1, 1
      %s246 = ssub.s32 %s245, 1
      loop: start=0, step=1, limit=1
      $region130: #{embeddings_forward.1} parent=128 // loop_pre_header
        _
      $region131: #{embeddings_forward.1} parent=128 // loop_header
        %s248 = sphi 0, %s252
        %p249 = scmp.ge.s32.totalorder %s248, 1
        %s253 = sphi %s235, %s235
        %s254 = sphi %s236, %s236
      $region132: #{embeddings_forward.1} parent=128 // loop_header_branch
        %251 = sbr.rel (%p249) target = $region136
      $region133: #{embeddings_forward.1} parent=128 // loop_body
        %v255 = vld [vmem:[%s253] sm:%s246]
        %256 = vst [vmem:[%s254] sm:%s246] %v255
      $region134: #{embeddings_forward.1} parent=128 // loop_footer
        %s252 = sadd.s32 1, %s248
      $region135: #{embeddings_forward.1} parent=128 // loop_footer_branch
        %247 = sbr.rel target = $region131
      $region136: #{embeddings_forward.1} parent=128 // loop_exit
        _
    $region129: #{embeddings_forward.1} parent=1 // pred_fallthru
      _
    // Predicated region
    $region148: #{embeddings_forward.1} parent=1 // pred_check
      _
    $region149: #{embeddings_forward.1} parent=1 // pred_check_branch
      %281 = sbr.rel (0) target = $region151
    $region150: #{embeddings_forward.1} parent=1 // pred_region
      %282 = vsyncadd [#allocation2], 16
    $region151: #{embeddings_forward.1} parent=1 // pred_fallthru
      _
    %s283 = sadd.s32 %s14, 5
    %s284 = sld [smem:[#allocation4 + %s283]]
    %p285 = scmp.gt.s32.totalorder %s284, 0
    %s286 = scalar_select %p285, %s284, 0
    %p287 = scmp.lt.s32.totalorder %s286, 49
    %s288 = scalar_select %p287, %s286, 49
    %s289 = scalar_lea.vmem %s1, %s288
    %s290 = scalar_lea.vmem [#allocation5], 5
    %p292 = scmp.lt.u32.totalorder 1, 8
    %p293 = pneg %p292
    // Predicated region
    $region152: #{embeddings_forward.1} parent=1 // pred_check
      _
    $region153: #{embeddings_forward.1} parent=1 // pred_check_branch
      %295 = sbr.rel (%p292) target = $region155
    $region154: #{embeddings_forward.1} parent=1 // pred_region
      %s311 = sand.u32 1, 7
      %p312 = scmp.eq.s32.totalorder %s311, 0
      %p313 = pneg %p312
      // Predicated region
      $region167: #{embeddings_forward.1} parent=154 // pred_check
        _
      $region168: #{embeddings_forward.1} parent=154 // pred_check_branch
        %315 = sbr.rel (%p312) target = $region170
      $region169: #{embeddings_forward.1} parent=154 // pred_region
        %s316 = sand.u32 1, 7
        %s317 = ssub.s32 1, %s316
        %s318 = scalar_lea.vmem %s289, %s317
        %s319 = ssub.s32 1, %s316
        %s320 = scalar_lea.vmem %s290, %s319 [#allocation5]
        %s321 = sshll.u32 1, %s316
        %s322 = ssub.s32 %s321, 1
        loop: start=0, step=1, limit=1
        $region171: #{embeddings_forward.1} parent=169 // loop_pre_header
          _
        $region172: #{embeddings_forward.1} parent=169 // loop_header
          %s324 = sphi 0, %s328
          %p325 = scmp.ge.s32.totalorder %s324, 1
          %s329 = sphi %s318, %s318
          %s330 = sphi %s320, %s320
        $region173: #{embeddings_forward.1} parent=169 // loop_header_branch
          %327 = sbr.rel (%p325) target = $region177
        $region174: #{embeddings_forward.1} parent=169 // loop_body
          %v331 = vld [vmem:[%s329] sm:%s322]
          %332 = vst [vmem:[%s330] sm:%s322] %v331
        $region175: #{embeddings_forward.1} parent=169 // loop_footer
          %s328 = sadd.s32 1, %s324
        $region176: #{embeddings_forward.1} parent=169 // loop_footer_branch
          %323 = sbr.rel target = $region172
        $region177: #{embeddings_forward.1} parent=169 // loop_exit
          _
      $region170: #{embeddings_forward.1} parent=154 // pred_fallthru
        _
    $region155: #{embeddings_forward.1} parent=1 // pred_fallthru
      _
    // Predicated region
    $region156: #{embeddings_forward.1} parent=1 // pred_check
      %p296 = pneg %p292
    $region157: #{embeddings_forward.1} parent=1 // pred_check_branch
      %298 = sbr.rel (%p296) target = $region159
    $region158: #{embeddings_forward.1} parent=1 // pred_region
      %s299 = sshll.u32 1, 1
      %s300 = ssub.s32 %s299, 1
      loop: start=0, step=1, limit=1
      $region160: #{embeddings_forward.1} parent=158 // loop_pre_header
        _
      $region161: #{embeddings_forward.1} parent=158 // loop_header
        %s302 = sphi 0, %s306
        %p303 = scmp.ge.s32.totalorder %s302, 1
        %s307 = sphi %s289, %s289
        %s308 = sphi %s290, %s290
      $region162: #{embeddings_forward.1} parent=158 // loop_header_branch
        %305 = sbr.rel (%p303) target = $region166
      $region163: #{embeddings_forward.1} parent=158 // loop_body
        %v309 = vld [vmem:[%s307] sm:%s300]
        %310 = vst [vmem:[%s308] sm:%s300] %v309
      $region164: #{embeddings_forward.1} parent=158 // loop_footer
        %s306 = sadd.s32 1, %s302
      $region165: #{embeddings_forward.1} parent=158 // loop_footer_branch
        %301 = sbr.rel target = $region161
      $region166: #{embeddings_forward.1} parent=158 // loop_exit
        _
    $region159: #{embeddings_forward.1} parent=1 // pred_fallthru
      _
    // Predicated region
    $region178: #{embeddings_forward.1} parent=1 // pred_check
      _
    $region179: #{embeddings_forward.1} parent=1 // pred_check_branch
      %335 = sbr.rel (0) target = $region181
    $region180: #{embeddings_forward.1} parent=1 // pred_region
      %336 = vsyncadd [#allocation2], 16
    $region181: #{embeddings_forward.1} parent=1 // pred_fallthru
      _
    %s337 = sadd.s32 %s14, 6
    %s338 = sld [smem:[#allocation4 + %s337]]
    %p339 = scmp.gt.s32.totalorder %s338, 0
    %s340 = scalar_select %p339, %s338, 0
    %p341 = scmp.lt.s32.totalorder %s340, 49
    %s342 = scalar_select %p341, %s340, 49
    %s343 = scalar_lea.vmem %s1, %s342
    %s344 = scalar_lea.vmem [#allocation5], 6
    %p346 = scmp.lt.u32.totalorder 1, 8
    %p347 = pneg %p346
    // Predicated region
    $region182: #{embeddings_forward.1} parent=1 // pred_check
      _
    $region183: #{embeddings_forward.1} parent=1 // pred_check_branch
      %349 = sbr.rel (%p346) target = $region185
    $region184: #{embeddings_forward.1} parent=1 // pred_region
      %s365 = sand.u32 1, 7
      %p366 = scmp.eq.s32.totalorder %s365, 0
      %p367 = pneg %p366
      // Predicated region
      $region197: #{embeddings_forward.1} parent=184 // pred_check
        _
      $region198: #{embeddings_forward.1} parent=184 // pred_check_branch
        %369 = sbr.rel (%p366) target = $region200
      $region199: #{embeddings_forward.1} parent=184 // pred_region
        %s370 = sand.u32 1, 7
        %s371 = ssub.s32 1, %s370
        %s372 = scalar_lea.vmem %s343, %s371
        %s373 = ssub.s32 1, %s370
        %s374 = scalar_lea.vmem %s344, %s373 [#allocation5]
        %s375 = sshll.u32 1, %s370
        %s376 = ssub.s32 %s375, 1
        loop: start=0, step=1, limit=1
        $region201: #{embeddings_forward.1} parent=199 // loop_pre_header
          _
        $region202: #{embeddings_forward.1} parent=199 // loop_header
          %s378 = sphi 0, %s382
          %p379 = scmp.ge.s32.totalorder %s378, 1
          %s383 = sphi %s372, %s372
          %s384 = sphi %s374, %s374
        $region203: #{embeddings_forward.1} parent=199 // loop_header_branch
          %381 = sbr.rel (%p379) target = $region207
        $region204: #{embeddings_forward.1} parent=199 // loop_body
          %v385 = vld [vmem:[%s383] sm:%s376]
          %386 = vst [vmem:[%s384] sm:%s376] %v385
        $region205: #{embeddings_forward.1} parent=199 // loop_footer
          %s382 = sadd.s32 1, %s378
        $region206: #{embeddings_forward.1} parent=199 // loop_footer_branch
          %377 = sbr.rel target = $region202
        $region207: #{embeddings_forward.1} parent=199 // loop_exit
          _
      $region200: #{embeddings_forward.1} parent=184 // pred_fallthru
        _
    $region185: #{embeddings_forward.1} parent=1 // pred_fallthru
      _
    // Predicated region
    $region186: #{embeddings_forward.1} parent=1 // pred_check
      %p350 = pneg %p346
    $region187: #{embeddings_forward.1} parent=1 // pred_check_branch
      %352 = sbr.rel (%p350) target = $region189
    $region188: #{embeddings_forward.1} parent=1 // pred_region
      %s353 = sshll.u32 1, 1
      %s354 = ssub.s32 %s353, 1
      loop: start=0, step=1, limit=1
      $region190: #{embeddings_forward.1} parent=188 // loop_pre_header
        _
      $region191: #{embeddings_forward.1} parent=188 // loop_header
        %s356 = sphi 0, %s360
        %p357 = scmp.ge.s32.totalorder %s356, 1
        %s361 = sphi %s343, %s343
        %s362 = sphi %s344, %s344
      $region192: #{embeddings_forward.1} parent=188 // loop_header_branch
        %359 = sbr.rel (%p357) target = $region196
      $region193: #{embeddings_forward.1} parent=188 // loop_body
        %v363 = vld [vmem:[%s361] sm:%s354]
        %364 = vst [vmem:[%s362] sm:%s354] %v363
      $region194: #{embeddings_forward.1} parent=188 // loop_footer
        %s360 = sadd.s32 1, %s356
      $region195: #{embeddings_forward.1} parent=188 // loop_footer_branch
        %355 = sbr.rel target = $region191
      $region196: #{embeddings_forward.1} parent=188 // loop_exit
        _
    $region189: #{embeddings_forward.1} parent=1 // pred_fallthru
      _
    // Predicated region
    $region208: #{embeddings_forward.1} parent=1 // pred_check
      _
    $region209: #{embeddings_forward.1} parent=1 // pred_check_branch
      %389 = sbr.rel (0) target = $region211
    $region210: #{embeddings_forward.1} parent=1 // pred_region
      %390 = vsyncadd [#allocation2], 16
    $region211: #{embeddings_forward.1} parent=1 // pred_fallthru
      _
    %s391 = sadd.s32 %s14, 7
    %s392 = sld [smem:[#allocation4 + %s391]]
    %p393 = scmp.gt.s32.totalorder %s392, 0
    %s394 = scalar_select %p393, %s392, 0
    %p395 = scmp.lt.s32.totalorder %s394, 49
    %s396 = scalar_select %p395, %s394, 49
    %s397 = scalar_lea.vmem %s1, %s396
    %s398 = scalar_lea.vmem [#allocation5], 7
    %p400 = scmp.lt.u32.totalorder 1, 8
    %p401 = pneg %p400
    // Predicated region
    $region212: #{embeddings_forward.1} parent=1 // pred_check
      _
    $region213: #{embeddings_forward.1} parent=1 // pred_check_branch
      %403 = sbr.rel (%p400) target = $region215
    $region214: #{embeddings_forward.1} parent=1 // pred_region
      %s419 = sand.u32 1, 7
      %p420 = scmp.eq.s32.totalorder %s419, 0
      %p421 = pneg %p420
      // Predicated region
      $region227: #{embeddings_forward.1} parent=214 // pred_check
        _
      $region228: #{embeddings_forward.1} parent=214 // pred_check_branch
        %423 = sbr.rel (%p420) target = $region230
      $region229: #{embeddings_forward.1} parent=214 // pred_region
        %s424 = sand.u32 1, 7
        %s425 = ssub.s32 1, %s424
        %s426 = scalar_lea.vmem %s397, %s425
        %s427 = ssub.s32 1, %s424
        %s428 = scalar_lea.vmem %s398, %s427 [#allocation5]
        %s429 = sshll.u32 1, %s424
        %s430 = ssub.s32 %s429, 1
        loop: start=0, step=1, limit=1
        $region231: #{embeddings_forward.1} parent=229 // loop_pre_header
          _
        $region232: #{embeddings_forward.1} parent=229 // loop_header
          %s432 = sphi 0, %s436
          %p433 = scmp.ge.s32.totalorder %s432, 1
          %s437 = sphi %s426, %s426
          %s438 = sphi %s428, %s428
        $region233: #{embeddings_forward.1} parent=229 // loop_header_branch
          %435 = sbr.rel (%p433) target = $region237
        $region234: #{embeddings_forward.1} parent=229 // loop_body
          %v439 = vld [vmem:[%s437] sm:%s430]
          %440 = vst [vmem:[%s438] sm:%s430] %v439
        $region235: #{embeddings_forward.1} parent=229 // loop_footer
          %s436 = sadd.s32 1, %s432
        $region236: #{embeddings_forward.1} parent=229 // loop_footer_branch
          %431 = sbr.rel target = $region232
        $region237: #{embeddings_forward.1} parent=229 // loop_exit
          _
      $region230: #{embeddings_forward.1} parent=214 // pred_fallthru
        _
    $region215: #{embeddings_forward.1} parent=1 // pred_fallthru
      _
    // Predicated region
    $region216: #{embeddings_forward.1} parent=1 // pred_check
      %p404 = pneg %p400
    $region217: #{embeddings_forward.1} parent=1 // pred_check_branch
      %406 = sbr.rel (%p404) target = $region219
    $region218: #{embeddings_forward.1} parent=1 // pred_region
      %s407 = sshll.u32 1, 1
      %s408 = ssub.s32 %s407, 1
      loop: start=0, step=1, limit=1
      $region220: #{embeddings_forward.1} parent=218 // loop_pre_header
        _
      $region221: #{embeddings_forward.1} parent=218 // loop_header
        %s410 = sphi 0, %s414
        %p411 = scmp.ge.s32.totalorder %s410, 1
        %s415 = sphi %s397, %s397
        %s416 = sphi %s398, %s398
      $region222: #{embeddings_forward.1} parent=218 // loop_header_branch
        %413 = sbr.rel (%p411) target = $region226
      $region223: #{embeddings_forward.1} parent=218 // loop_body
        %v417 = vld [vmem:[%s415] sm:%s408]
        %418 = vst [vmem:[%s416] sm:%s408] %v417
      $region224: #{embeddings_forward.1} parent=218 // loop_footer
        %s414 = sadd.s32 1, %s410
      $region225: #{embeddings_forward.1} parent=218 // loop_footer_branch
        %409 = sbr.rel target = $region221
      $region226: #{embeddings_forward.1} parent=218 // loop_exit
        _
    $region219: #{embeddings_forward.1} parent=1 // pred_fallthru
      _
    // Predicated region
    $region238: #{embeddings_forward.1} parent=1 // pred_check
      _
    $region239: #{embeddings_forward.1} parent=1 // pred_check_branch
      %443 = sbr.rel (0) target = $region241
    $region240: #{embeddings_forward.1} parent=1 // pred_region
      %444 = vsyncadd [#allocation2], 16
    $region241: #{embeddings_forward.1} parent=1 // pred_fallthru
      _
    %s445 = sadd.s32 %s14, 8
    %s446 = sld [smem:[#allocation4 + %s445]]
    %p447 = scmp.gt.s32.totalorder %s446, 0
    %s448 = scalar_select %p447, %s446, 0
    %p449 = scmp.lt.s32.totalorder %s448, 49
    %s450 = scalar_select %p449, %s448, 49
    %s451 = scalar_lea.vmem %s1, %s450
    %s452 = scalar_lea.vmem [#allocation5], 8
    %p454 = scmp.lt.u32.totalorder 1, 8
    %p455 = pneg %p454
    // Predicated region
    $region242: #{embeddings_forward.1} parent=1 // pred_check
      _
    $region243: #{embeddings_forward.1} parent=1 // pred_check_branch
      %457 = sbr.rel (%p454) target = $region245
    $region244: #{embeddings_forward.1} parent=1 // pred_region
      %s473 = sand.u32 1, 7
      %p474 = scmp.eq.s32.totalorder %s473, 0
      %p475 = pneg %p474
      // Predicated region
      $region257: #{embeddings_forward.1} parent=244 // pred_check
        _
      $region258: #{embeddings_forward.1} parent=244 // pred_check_branch
        %477 = sbr.rel (%p474) target = $region260
      $region259: #{embeddings_forward.1} parent=244 // pred_region
        %s478 = sand.u32 1, 7
        %s479 = ssub.s32 1, %s478
        %s480 = scalar_lea.vmem %s451, %s479
        %s481 = ssub.s32 1, %s478
        %s482 = scalar_lea.vmem %s452, %s481 [#allocation5]
        %s483 = sshll.u32 1, %s478
        %s484 = ssub.s32 %s483, 1
        loop: start=0, step=1, limit=1
        $region261: #{embeddings_forward.1} parent=259 // loop_pre_header
          _
        $region262: #{embeddings_forward.1} parent=259 // loop_header
          %s486 = sphi 0, %s490
          %p487 = scmp.ge.s32.totalorder %s486, 1
          %s491 = sphi %s480, %s480
          %s492 = sphi %s482, %s482
        $region263: #{embeddings_forward.1} parent=259 // loop_header_branch
          %489 = sbr.rel (%p487) target = $region267
        $region264: #{embeddings_forward.1} parent=259 // loop_body
          %v493 = vld [vmem:[%s491] sm:%s484]
          %494 = vst [vmem:[%s492] sm:%s484] %v493
        $region265: #{embeddings_forward.1} parent=259 // loop_footer
          %s490 = sadd.s32 1, %s486
        $region266: #{embeddings_forward.1} parent=259 // loop_footer_branch
          %485 = sbr.rel target = $region262
        $region267: #{embeddings_forward.1} parent=259 // loop_exit
          _
      $region260: #{embeddings_forward.1} parent=244 // pred_fallthru
        _
    $region245: #{embeddings_forward.1} parent=1 // pred_fallthru
      _
    // Predicated region
    $region246: #{embeddings_forward.1} parent=1 // pred_check
      %p458 = pneg %p454
    $region247: #{embeddings_forward.1} parent=1 // pred_check_branch
      %460 = sbr.rel (%p458) target = $region249
    $region248: #{embeddings_forward.1} parent=1 // pred_region
      %s461 = sshll.u32 1, 1
      %s462 = ssub.s32 %s461, 1
      loop: start=0, step=1, limit=1
      $region250: #{embeddings_forward.1} parent=248 // loop_pre_header
        _
      $region251: #{embeddings_forward.1} parent=248 // loop_header
        %s464 = sphi 0, %s468
        %p465 = scmp.ge.s32.totalorder %s464, 1
        %s469 = sphi %s451, %s451
        %s470 = sphi %s452, %s452
      $region252: #{embeddings_forward.1} parent=248 // loop_header_branch
        %467 = sbr.rel (%p465) target = $region256
      $region253: #{embeddings_forward.1} parent=248 // loop_body
        %v471 = vld [vmem:[%s469] sm:%s462]
        %472 = vst [vmem:[%s470] sm:%s462] %v471
      $region254: #{embeddings_forward.1} parent=248 // loop_footer
        %s468 = sadd.s32 1, %s464
      $region255: #{embeddings_forward.1} parent=248 // loop_footer_branch
        %463 = sbr.rel target = $region251
      $region256: #{embeddings_forward.1} parent=248 // loop_exit
        _
    $region249: #{embeddings_forward.1} parent=1 // pred_fallthru
      _
    // Predicated region
    $region268: #{embeddings_forward.1} parent=1 // pred_check
      _
    $region269: #{embeddings_forward.1} parent=1 // pred_check_branch
      %497 = sbr.rel (0) target = $region271
    $region270: #{embeddings_forward.1} parent=1 // pred_region
      %498 = vsyncadd [#allocation2], 16
    $region271: #{embeddings_forward.1} parent=1 // pred_fallthru
      _
    %s499 = sadd.s32 %s14, 9
    %s500 = sld [smem:[#allocation4 + %s499]]
    %p501 = scmp.gt.s32.totalorder %s500, 0
    %s502 = scalar_select %p501, %s500, 0
    %p503 = scmp.lt.s32.totalorder %s502, 49
    %s504 = scalar_select %p503, %s502, 49
    %s505 = scalar_lea.vmem %s1, %s504
    %s506 = scalar_lea.vmem [#allocation5], 9
    %p508 = scmp.lt.u32.totalorder 1, 8
    %p509 = pneg %p508
    // Predicated region
    $region272: #{embeddings_forward.1} parent=1 // pred_check
      _
    $region273: #{embeddings_forward.1} parent=1 // pred_check_branch
      %511 = sbr.rel (%p508) target = $region275
    $region274: #{embeddings_forward.1} parent=1 // pred_region
      %s527 = sand.u32 1, 7
      %p528 = scmp.eq.s32.totalorder %s527, 0
      %p529 = pneg %p528
      // Predicated region
      $region287: #{embeddings_forward.1} parent=274 // pred_check
        _
      $region288: #{embeddings_forward.1} parent=274 // pred_check_branch
        %531 = sbr.rel (%p528) target = $region290
      $region289: #{embeddings_forward.1} parent=274 // pred_region
        %s532 = sand.u32 1, 7
        %s533 = ssub.s32 1, %s532
        %s534 = scalar_lea.vmem %s505, %s533
        %s535 = ssub.s32 1, %s532
        %s536 = scalar_lea.vmem %s506, %s535 [#allocation5]
        %s537 = sshll.u32 1, %s532
        %s538 = ssub.s32 %s537, 1
        loop: start=0, step=1, limit=1
        $region291: #{embeddings_forward.1} parent=289 // loop_pre_header
          _
        $region292: #{embeddings_forward.1} parent=289 // loop_header
          %s540 = sphi 0, %s544
          %p541 = scmp.ge.s32.totalorder %s540, 1
          %s545 = sphi %s534, %s534
          %s546 = sphi %s536, %s536
        $region293: #{embeddings_forward.1} parent=289 // loop_header_branch
          %543 = sbr.rel (%p541) target = $region297
        $region294: #{embeddings_forward.1} parent=289 // loop_body
          %v547 = vld [vmem:[%s545] sm:%s538]
          %548 = vst [vmem:[%s546] sm:%s538] %v547
        $region295: #{embeddings_forward.1} parent=289 // loop_footer
          %s544 = sadd.s32 1, %s540
        $region296: #{embeddings_forward.1} parent=289 // loop_footer_branch
          %539 = sbr.rel target = $region292
        $region297: #{embeddings_forward.1} parent=289 // loop_exit
          _
      $region290: #{embeddings_forward.1} parent=274 // pred_fallthru
        _
    $region275: #{embeddings_forward.1} parent=1 // pred_fallthru
      _
    // Predicated region
    $region276: #{embeddings_forward.1} parent=1 // pred_check
      %p512 = pneg %p508
    $region277: #{embeddings_forward.1} parent=1 // pred_check_branch
      %514 = sbr.rel (%p512) target = $region279
    $region278: #{embeddings_forward.1} parent=1 // pred_region
      %s515 = sshll.u32 1, 1
      %s516 = ssub.s32 %s515, 1
      loop: start=0, step=1, limit=1
      $region280: #{embeddings_forward.1} parent=278 // loop_pre_header
        _
      $region281: #{embeddings_forward.1} parent=278 // loop_header
        %s518 = sphi 0, %s522
        %p519 = scmp.ge.s32.totalorder %s518, 1
        %s523 = sphi %s505, %s505
        %s524 = sphi %s506, %s506
      $region282: #{embeddings_forward.1} parent=278 // loop_header_branch
        %521 = sbr.rel (%p519) target = $region286
      $region283: #{embeddings_forward.1} parent=278 // loop_body
        %v525 = vld [vmem:[%s523] sm:%s516]
        %526 = vst [vmem:[%s524] sm:%s516] %v525
      $region284: #{embeddings_forward.1} parent=278 // loop_footer
        %s522 = sadd.s32 1, %s518
      $region285: #{embeddings_forward.1} parent=278 // loop_footer_branch
        %517 = sbr.rel target = $region281
      $region286: #{embeddings_forward.1} parent=278 // loop_exit
        _
    $region279: #{embeddings_forward.1} parent=1 // pred_fallthru
      _
    // Predicated region
    $region298: #{embeddings_forward.1} parent=1 // pred_check
      _
    $region299: #{embeddings_forward.1} parent=1 // pred_check_branch
      %551 = sbr.rel (0) target = $region301
    $region300: #{embeddings_forward.1} parent=1 // pred_region
      %552 = vsyncadd [#allocation2], 16
    $region301: #{embeddings_forward.1} parent=1 // pred_fallthru
      _
    %s553 = sadd.s32 %s14, 10
    %s554 = sld [smem:[#allocation4 + %s553]]
    %p555 = scmp.gt.s32.totalorder %s554, 0
    %s556 = scalar_select %p555, %s554, 0
    %p557 = scmp.lt.s32.totalorder %s556, 49
    %s558 = scalar_select %p557, %s556, 49
    %s559 = scalar_lea.vmem %s1, %s558
    %s560 = scalar_lea.vmem [#allocation5], 10
    %p562 = scmp.lt.u32.totalorder 1, 8
    %p563 = pneg %p562
    // Predicated region
    $region302: #{embeddings_forward.1} parent=1 // pred_check
      _
    $region303: #{embeddings_forward.1} parent=1 // pred_check_branch
      %565 = sbr.rel (%p562) target = $region305
    $region304: #{embeddings_forward.1} parent=1 // pred_region
      %s581 = sand.u32 1, 7
      %p582 = scmp.eq.s32.totalorder %s581, 0
      %p583 = pneg %p582
      // Predicated region
      $region317: #{embeddings_forward.1} parent=304 // pred_check
        _
      $region318: #{embeddings_forward.1} parent=304 // pred_check_branch
        %585 = sbr.rel (%p582) target = $region320
      $region319: #{embeddings_forward.1} parent=304 // pred_region
        %s586 = sand.u32 1, 7
        %s587 = ssub.s32 1, %s586
        %s588 = scalar_lea.vmem %s559, %s587
        %s589 = ssub.s32 1, %s586
        %s590 = scalar_lea.vmem %s560, %s589 [#allocation5]
        %s591 = sshll.u32 1, %s586
        %s592 = ssub.s32 %s591, 1
        loop: start=0, step=1, limit=1
        $region321: #{embeddings_forward.1} parent=319 // loop_pre_header
          _
        $region322: #{embeddings_forward.1} parent=319 // loop_header
          %s594 = sphi 0, %s598
          %p595 = scmp.ge.s32.totalorder %s594, 1
          %s599 = sphi %s588, %s588
          %s600 = sphi %s590, %s590
        $region323: #{embeddings_forward.1} parent=319 // loop_header_branch
          %597 = sbr.rel (%p595) target = $region327
        $region324: #{embeddings_forward.1} parent=319 // loop_body
          %v601 = vld [vmem:[%s599] sm:%s592]
          %602 = vst [vmem:[%s600] sm:%s592] %v601
        $region325: #{embeddings_forward.1} parent=319 // loop_footer
          %s598 = sadd.s32 1, %s594
        $region326: #{embeddings_forward.1} parent=319 // loop_footer_branch
          %593 = sbr.rel target = $region322
        $region327: #{embeddings_forward.1} parent=319 // loop_exit
          _
      $region320: #{embeddings_forward.1} parent=304 // pred_fallthru
        _
    $region305: #{embeddings_forward.1} parent=1 // pred_fallthru
      _
    // Predicated region
    $region306: #{embeddings_forward.1} parent=1 // pred_check
      %p566 = pneg %p562
    $region307: #{embeddings_forward.1} parent=1 // pred_check_branch
      %568 = sbr.rel (%p566) target = $region309
    $region308: #{embeddings_forward.1} parent=1 // pred_region
      %s569 = sshll.u32 1, 1
      %s570 = ssub.s32 %s569, 1
      loop: start=0, step=1, limit=1
      $region310: #{embeddings_forward.1} parent=308 // loop_pre_header
        _
      $region311: #{embeddings_forward.1} parent=308 // loop_header
        %s572 = sphi 0, %s576
        %p573 = scmp.ge.s32.totalorder %s572, 1
        %s577 = sphi %s559, %s559
        %s578 = sphi %s560, %s560
      $region312: #{embeddings_forward.1} parent=308 // loop_header_branch
        %575 = sbr.rel (%p573) target = $region316
      $region313: #{embeddings_forward.1} parent=308 // loop_body
        %v579 = vld [vmem:[%s577] sm:%s570]
        %580 = vst [vmem:[%s578] sm:%s570] %v579
      $region314: #{embeddings_forward.1} parent=308 // loop_footer
        %s576 = sadd.s32 1, %s572
      $region315: #{embeddings_forward.1} parent=308 // loop_footer_branch
        %571 = sbr.rel target = $region311
      $region316: #{embeddings_forward.1} parent=308 // loop_exit
        _
    $region309: #{embeddings_forward.1} parent=1 // pred_fallthru
      _
    // Predicated region
    $region328: #{embeddings_forward.1} parent=1 // pred_check
      _
    $region329: #{embeddings_forward.1} parent=1 // pred_check_branch
      %605 = sbr.rel (0) target = $region331
    $region330: #{embeddings_forward.1} parent=1 // pred_region
      %606 = vsyncadd [#allocation2], 16
    $region331: #{embeddings_forward.1} parent=1 // pred_fallthru
      _
    %s607 = sadd.s32 %s14, 11
    %s608 = sld [smem:[#allocation4 + %s607]]
    %p609 = scmp.gt.s32.totalorder %s608, 0
    %s610 = scalar_select %p609, %s608, 0
    %p611 = scmp.lt.s32.totalorder %s610, 49
    %s612 = scalar_select %p611, %s610, 49
    %s613 = scalar_lea.vmem %s1, %s612
    %s614 = scalar_lea.vmem [#allocation5], 11
    %p616 = scmp.lt.u32.totalorder 1, 8
    %p617 = pneg %p616
    // Predicated region
    $region332: #{embeddings_forward.1} parent=1 // pred_check
      _
    $region333: #{embeddings_forward.1} parent=1 // pred_check_branch
      %619 = sbr.rel (%p616) target = $region335
    $region334: #{embeddings_forward.1} parent=1 // pred_region
      %s635 = sand.u32 1, 7
      %p636 = scmp.eq.s32.totalorder %s635, 0
      %p637 = pneg %p636
      // Predicated region
      $region347: #{embeddings_forward.1} parent=334 // pred_check
        _
      $region348: #{embeddings_forward.1} parent=334 // pred_check_branch
        %639 = sbr.rel (%p636) target = $region350
      $region349: #{embeddings_forward.1} parent=334 // pred_region
        %s640 = sand.u32 1, 7
        %s641 = ssub.s32 1, %s640
        %s642 = scalar_lea.vmem %s613, %s641
        %s643 = ssub.s32 1, %s640
        %s644 = scalar_lea.vmem %s614, %s643 [#allocation5]
        %s645 = sshll.u32 1, %s640
        %s646 = ssub.s32 %s645, 1
        loop: start=0, step=1, limit=1
        $region351: #{embeddings_forward.1} parent=349 // loop_pre_header
          _
        $region352: #{embeddings_forward.1} parent=349 // loop_header
          %s648 = sphi 0, %s652
          %p649 = scmp.ge.s32.totalorder %s648, 1
          %s653 = sphi %s642, %s642
          %s654 = sphi %s644, %s644
        $region353: #{embeddings_forward.1} parent=349 // loop_header_branch
          %651 = sbr.rel (%p649) target = $region357
        $region354: #{embeddings_forward.1} parent=349 // loop_body
          %v655 = vld [vmem:[%s653] sm:%s646]
          %656 = vst [vmem:[%s654] sm:%s646] %v655
        $region355: #{embeddings_forward.1} parent=349 // loop_footer
          %s652 = sadd.s32 1, %s648
        $region356: #{embeddings_forward.1} parent=349 // loop_footer_branch
          %647 = sbr.rel target = $region352
        $region357: #{embeddings_forward.1} parent=349 // loop_exit
          _
      $region350: #{embeddings_forward.1} parent=334 // pred_fallthru
        _
    $region335: #{embeddings_forward.1} parent=1 // pred_fallthru
      _
    // Predicated region
    $region336: #{embeddings_forward.1} parent=1 // pred_check
      %p620 = pneg %p616
    $region337: #{embeddings_forward.1} parent=1 // pred_check_branch
      %622 = sbr.rel (%p620) target = $region339
    $region338: #{embeddings_forward.1} parent=1 // pred_region
      %s623 = sshll.u32 1, 1
      %s624 = ssub.s32 %s623, 1
      loop: start=0, step=1, limit=1
      $region340: #{embeddings_forward.1} parent=338 // loop_pre_header
        _
      $region341: #{embeddings_forward.1} parent=338 // loop_header
        %s626 = sphi 0, %s630
        %p627 = scmp.ge.s32.totalorder %s626, 1
        %s631 = sphi %s613, %s613
        %s632 = sphi %s614, %s614
      $region342: #{embeddings_forward.1} parent=338 // loop_header_branch
        %629 = sbr.rel (%p627) target = $region346
      $region343: #{embeddings_forward.1} parent=338 // loop_body
        %v633 = vld [vmem:[%s631] sm:%s624]
        %634 = vst [vmem:[%s632] sm:%s624] %v633
      $region344: #{embeddings_forward.1} parent=338 // loop_footer
        %s630 = sadd.s32 1, %s626
      $region345: #{embeddings_forward.1} parent=338 // loop_footer_branch
        %625 = sbr.rel target = $region341
      $region346: #{embeddings_forward.1} parent=338 // loop_exit
        _
    $region339: #{embeddings_forward.1} parent=1 // pred_fallthru
      _
    // Predicated region
    $region358: #{embeddings_forward.1} parent=1 // pred_check
      _
    $region359: #{embeddings_forward.1} parent=1 // pred_check_branch
      %659 = sbr.rel (0) target = $region361
    $region360: #{embeddings_forward.1} parent=1 // pred_region
      %660 = vsyncadd [#allocation2], 16
    $region361: #{embeddings_forward.1} parent=1 // pred_fallthru
      _
    %s661 = sadd.s32 %s14, 12
    %s662 = sld [smem:[#allocation4 + %s661]]
    %p663 = scmp.gt.s32.totalorder %s662, 0
    %s664 = scalar_select %p663, %s662, 0
    %p665 = scmp.lt.s32.totalorder %s664, 49
    %s666 = scalar_select %p665, %s664, 49
    %s667 = scalar_lea.vmem %s1, %s666
    %s668 = scalar_lea.vmem [#allocation5], 12
    %p670 = scmp.lt.u32.totalorder 1, 8
    %p671 = pneg %p670
    // Predicated region
    $region362: #{embeddings_forward.1} parent=1 // pred_check
      _
    $region363: #{embeddings_forward.1} parent=1 // pred_check_branch
      %673 = sbr.rel (%p670) target = $region365
    $region364: #{embeddings_forward.1} parent=1 // pred_region
      %s689 = sand.u32 1, 7
      %p690 = scmp.eq.s32.totalorder %s689, 0
      %p691 = pneg %p690
      // Predicated region
      $region377: #{embeddings_forward.1} parent=364 // pred_check
        _
      $region378: #{embeddings_forward.1} parent=364 // pred_check_branch
        %693 = sbr.rel (%p690) target = $region380
      $region379: #{embeddings_forward.1} parent=364 // pred_region
        %s694 = sand.u32 1, 7
        %s695 = ssub.s32 1, %s694
        %s696 = scalar_lea.vmem %s667, %s695
        %s697 = ssub.s32 1, %s694
        %s698 = scalar_lea.vmem %s668, %s697 [#allocation5]
        %s699 = sshll.u32 1, %s694
        %s700 = ssub.s32 %s699, 1
        loop: start=0, step=1, limit=1
        $region381: #{embeddings_forward.1} parent=379 // loop_pre_header
          _
        $region382: #{embeddings_forward.1} parent=379 // loop_header
          %s702 = sphi 0, %s706
          %p703 = scmp.ge.s32.totalorder %s702, 1
          %s707 = sphi %s696, %s696
          %s708 = sphi %s698, %s698
        $region383: #{embeddings_forward.1} parent=379 // loop_header_branch
          %705 = sbr.rel (%p703) target = $region387
        $region384: #{embeddings_forward.1} parent=379 // loop_body
          %v709 = vld [vmem:[%s707] sm:%s700]
          %710 = vst [vmem:[%s708] sm:%s700] %v709
        $region385: #{embeddings_forward.1} parent=379 // loop_footer
          %s706 = sadd.s32 1, %s702
        $region386: #{embeddings_forward.1} parent=379 // loop_footer_branch
          %701 = sbr.rel target = $region382
        $region387: #{embeddings_forward.1} parent=379 // loop_exit
          _
      $region380: #{embeddings_forward.1} parent=364 // pred_fallthru
        _
    $region365: #{embeddings_forward.1} parent=1 // pred_fallthru
      _
    // Predicated region
    $region366: #{embeddings_forward.1} parent=1 // pred_check
      %p674 = pneg %p670
    $region367: #{embeddings_forward.1} parent=1 // pred_check_branch
      %676 = sbr.rel (%p674) target = $region369
    $region368: #{embeddings_forward.1} parent=1 // pred_region
      %s677 = sshll.u32 1, 1
      %s678 = ssub.s32 %s677, 1
      loop: start=0, step=1, limit=1
      $region370: #{embeddings_forward.1} parent=368 // loop_pre_header
        _
      $region371: #{embeddings_forward.1} parent=368 // loop_header
        %s680 = sphi 0, %s684
        %p681 = scmp.ge.s32.totalorder %s680, 1
        %s685 = sphi %s667, %s667
        %s686 = sphi %s668, %s668
      $region372: #{embeddings_forward.1} parent=368 // loop_header_branch
        %683 = sbr.rel (%p681) target = $region376
      $region373: #{embeddings_forward.1} parent=368 // loop_body
        %v687 = vld [vmem:[%s685] sm:%s678]
        %688 = vst [vmem:[%s686] sm:%s678] %v687
      $region374: #{embeddings_forward.1} parent=368 // loop_footer
        %s684 = sadd.s32 1, %s680
      $region375: #{embeddings_forward.1} parent=368 // loop_footer_branch
        %679 = sbr.rel target = $region371
      $region376: #{embeddings_forward.1} parent=368 // loop_exit
        _
    $region369: #{embeddings_forward.1} parent=1 // pred_fallthru
      _
    // Predicated region
    $region388: #{embeddings_forward.1} parent=1 // pred_check
      _
    $region389: #{embeddings_forward.1} parent=1 // pred_check_branch
      %713 = sbr.rel (0) target = $region391
    $region390: #{embeddings_forward.1} parent=1 // pred_region
      %714 = vsyncadd [#allocation2], 16
    $region391: #{embeddings_forward.1} parent=1 // pred_fallthru
      _
    %s715 = sadd.s32 %s14, 13
    %s716 = sld [smem:[#allocation4 + %s715]]
    %p717 = scmp.gt.s32.totalorder %s716, 0
    %s718 = scalar_select %p717, %s716, 0
    %p719 = scmp.lt.s32.totalorder %s718, 49
    %s720 = scalar_select %p719, %s718, 49
    %s721 = scalar_lea.vmem %s1, %s720
    %s722 = scalar_lea.vmem [#allocation5], 13
    %p724 = scmp.lt.u32.totalorder 1, 8
    %p725 = pneg %p724
    // Predicated region
    $region392: #{embeddings_forward.1} parent=1 // pred_check
      _
    $region393: #{embeddings_forward.1} parent=1 // pred_check_branch
      %727 = sbr.rel (%p724) target = $region395
    $region394: #{embeddings_forward.1} parent=1 // pred_region
      %s743 = sand.u32 1, 7
      %p744 = scmp.eq.s32.totalorder %s743, 0
      %p745 = pneg %p744
      // Predicated region
      $region407: #{embeddings_forward.1} parent=394 // pred_check
        _
      $region408: #{embeddings_forward.1} parent=394 // pred_check_branch
        %747 = sbr.rel (%p744) target = $region410
      $region409: #{embeddings_forward.1} parent=394 // pred_region
        %s748 = sand.u32 1, 7
        %s749 = ssub.s32 1, %s748
        %s750 = scalar_lea.vmem %s721, %s749
        %s751 = ssub.s32 1, %s748
        %s752 = scalar_lea.vmem %s722, %s751 [#allocation5]
        %s753 = sshll.u32 1, %s748
        %s754 = ssub.s32 %s753, 1
        loop: start=0, step=1, limit=1
        $region411: #{embeddings_forward.1} parent=409 // loop_pre_header
          _
        $region412: #{embeddings_forward.1} parent=409 // loop_header
          %s756 = sphi 0, %s760
          %p757 = scmp.ge.s32.totalorder %s756, 1
          %s761 = sphi %s750, %s750
          %s762 = sphi %s752, %s752
        $region413: #{embeddings_forward.1} parent=409 // loop_header_branch
          %759 = sbr.rel (%p757) target = $region417
        $region414: #{embeddings_forward.1} parent=409 // loop_body
          %v763 = vld [vmem:[%s761] sm:%s754]
          %764 = vst [vmem:[%s762] sm:%s754] %v763
        $region415: #{embeddings_forward.1} parent=409 // loop_footer
          %s760 = sadd.s32 1, %s756
        $region416: #{embeddings_forward.1} parent=409 // loop_footer_branch
          %755 = sbr.rel target = $region412
        $region417: #{embeddings_forward.1} parent=409 // loop_exit
          _
      $region410: #{embeddings_forward.1} parent=394 // pred_fallthru
        _
    $region395: #{embeddings_forward.1} parent=1 // pred_fallthru
      _
    // Predicated region
    $region396: #{embeddings_forward.1} parent=1 // pred_check
      %p728 = pneg %p724
    $region397: #{embeddings_forward.1} parent=1 // pred_check_branch
      %730 = sbr.rel (%p728) target = $region399
    $region398: #{embeddings_forward.1} parent=1 // pred_region
      %s731 = sshll.u32 1, 1
      %s732 = ssub.s32 %s731, 1
      loop: start=0, step=1, limit=1
      $region400: #{embeddings_forward.1} parent=398 // loop_pre_header
        _
      $region401: #{embeddings_forward.1} parent=398 // loop_header
        %s734 = sphi 0, %s738
        %p735 = scmp.ge.s32.totalorder %s734, 1
        %s739 = sphi %s721, %s721
        %s740 = sphi %s722, %s722
      $region402: #{embeddings_forward.1} parent=398 // loop_header_branch
        %737 = sbr.rel (%p735) target = $region406
      $region403: #{embeddings_forward.1} parent=398 // loop_body
        %v741 = vld [vmem:[%s739] sm:%s732]
        %742 = vst [vmem:[%s740] sm:%s732] %v741
      $region404: #{embeddings_forward.1} parent=398 // loop_footer
        %s738 = sadd.s32 1, %s734
      $region405: #{embeddings_forward.1} parent=398 // loop_footer_branch
        %733 = sbr.rel target = $region401
      $region406: #{embeddings_forward.1} parent=398 // loop_exit
        _
    $region399: #{embeddings_forward.1} parent=1 // pred_fallthru
      _
    // Predicated region
    $region418: #{embeddings_forward.1} parent=1 // pred_check
      _
    $region419: #{embeddings_forward.1} parent=1 // pred_check_branch
      %767 = sbr.rel (0) target = $region421
    $region420: #{embeddings_forward.1} parent=1 // pred_region
      %768 = vsyncadd [#allocation2], 16
    $region421: #{embeddings_forward.1} parent=1 // pred_fallthru
      _
    %s769 = sadd.s32 %s14, 14
    %s770 = sld [smem:[#allocation4 + %s769]]
    %p771 = scmp.gt.s32.totalorder %s770, 0
    %s772 = scalar_select %p771, %s770, 0
    %p773 = scmp.lt.s32.totalorder %s772, 49
    %s774 = scalar_select %p773, %s772, 49
    %s775 = scalar_lea.vmem %s1, %s774
    %s776 = scalar_lea.vmem [#allocation5], 14
    %p778 = scmp.lt.u32.totalorder 1, 8
    %p779 = pneg %p778
    // Predicated region
    $region422: #{embeddings_forward.1} parent=1 // pred_check
      _
    $region423: #{embeddings_forward.1} parent=1 // pred_check_branch
      %781 = sbr.rel (%p778) target = $region425
    $region424: #{embeddings_forward.1} parent=1 // pred_region
      %s797 = sand.u32 1, 7
      %p798 = scmp.eq.s32.totalorder %s797, 0
      %p799 = pneg %p798
      // Predicated region
      $region437: #{embeddings_forward.1} parent=424 // pred_check
        _
      $region438: #{embeddings_forward.1} parent=424 // pred_check_branch
        %801 = sbr.rel (%p798) target = $region440
      $region439: #{embeddings_forward.1} parent=424 // pred_region
        %s802 = sand.u32 1, 7
        %s803 = ssub.s32 1, %s802
        %s804 = scalar_lea.vmem %s775, %s803
        %s805 = ssub.s32 1, %s802
        %s806 = scalar_lea.vmem %s776, %s805 [#allocation5]
        %s807 = sshll.u32 1, %s802
        %s808 = ssub.s32 %s807, 1
        loop: start=0, step=1, limit=1
        $region441: #{embeddings_forward.1} parent=439 // loop_pre_header
          _
        $region442: #{embeddings_forward.1} parent=439 // loop_header
          %s810 = sphi 0, %s814
          %p811 = scmp.ge.s32.totalorder %s810, 1
          %s815 = sphi %s804, %s804
          %s816 = sphi %s806, %s806
        $region443: #{embeddings_forward.1} parent=439 // loop_header_branch
          %813 = sbr.rel (%p811) target = $region447
        $region444: #{embeddings_forward.1} parent=439 // loop_body
          %v817 = vld [vmem:[%s815] sm:%s808]
          %818 = vst [vmem:[%s816] sm:%s808] %v817
        $region445: #{embeddings_forward.1} parent=439 // loop_footer
          %s814 = sadd.s32 1, %s810
        $region446: #{embeddings_forward.1} parent=439 // loop_footer_branch
          %809 = sbr.rel target = $region442
        $region447: #{embeddings_forward.1} parent=439 // loop_exit
          _
      $region440: #{embeddings_forward.1} parent=424 // pred_fallthru
        _
    $region425: #{embeddings_forward.1} parent=1 // pred_fallthru
      _
    // Predicated region
    $region426: #{embeddings_forward.1} parent=1 // pred_check
      %p782 = pneg %p778
    $region427: #{embeddings_forward.1} parent=1 // pred_check_branch
      %784 = sbr.rel (%p782) target = $region429
    $region428: #{embeddings_forward.1} parent=1 // pred_region
      %s785 = sshll.u32 1, 1
      %s786 = ssub.s32 %s785, 1
      loop: start=0, step=1, limit=1
      $region430: #{embeddings_forward.1} parent=428 // loop_pre_header
        _
      $region431: #{embeddings_forward.1} parent=428 // loop_header
        %s788 = sphi 0, %s792
        %p789 = scmp.ge.s32.totalorder %s788, 1
        %s793 = sphi %s775, %s775
        %s794 = sphi %s776, %s776
      $region432: #{embeddings_forward.1} parent=428 // loop_header_branch
        %791 = sbr.rel (%p789) target = $region436
      $region433: #{embeddings_forward.1} parent=428 // loop_body
        %v795 = vld [vmem:[%s793] sm:%s786]
        %796 = vst [vmem:[%s794] sm:%s786] %v795
      $region434: #{embeddings_forward.1} parent=428 // loop_footer
        %s792 = sadd.s32 1, %s788
      $region435: #{embeddings_forward.1} parent=428 // loop_footer_branch
        %787 = sbr.rel target = $region431
      $region436: #{embeddings_forward.1} parent=428 // loop_exit
        _
    $region429: #{embeddings_forward.1} parent=1 // pred_fallthru
      _
    // Predicated region
    $region448: #{embeddings_forward.1} parent=1 // pred_check
      _
    $region449: #{embeddings_forward.1} parent=1 // pred_check_branch
      %821 = sbr.rel (0) target = $region451
    $region450: #{embeddings_forward.1} parent=1 // pred_region
      %822 = vsyncadd [#allocation2], 16
    $region451: #{embeddings_forward.1} parent=1 // pred_fallthru
      _
    %s823 = sadd.s32 %s14, 15
    %s824 = sld [smem:[#allocation4 + %s823]]
    %p825 = scmp.gt.s32.totalorder %s824, 0
    %s826 = scalar_select %p825, %s824, 0
    %p827 = scmp.lt.s32.totalorder %s826, 49
    %s828 = scalar_select %p827, %s826, 49
    %s829 = scalar_lea.vmem %s1, %s828
    %s830 = scalar_lea.vmem [#allocation5], 15
    %p832 = scmp.lt.u32.totalorder 1, 8
    %p833 = pneg %p832
    // Predicated region
    $region452: #{embeddings_forward.1} parent=1 // pred_check
      _
    $region453: #{embeddings_forward.1} parent=1 // pred_check_branch
      %835 = sbr.rel (%p832) target = $region455
    $region454: #{embeddings_forward.1} parent=1 // pred_region
      %s851 = sand.u32 1, 7
      %p852 = scmp.eq.s32.totalorder %s851, 0
      %p853 = pneg %p852
      // Predicated region
      $region467: #{embeddings_forward.1} parent=454 // pred_check
        _
      $region468: #{embeddings_forward.1} parent=454 // pred_check_branch
        %855 = sbr.rel (%p852) target = $region470
      $region469: #{embeddings_forward.1} parent=454 // pred_region
        %s856 = sand.u32 1, 7
        %s857 = ssub.s32 1, %s856
        %s858 = scalar_lea.vmem %s829, %s857
        %s859 = ssub.s32 1, %s856
        %s860 = scalar_lea.vmem %s830, %s859 [#allocation5]
        %s861 = sshll.u32 1, %s856
        %s862 = ssub.s32 %s861, 1
        loop: start=0, step=1, limit=1
        $region471: #{embeddings_forward.1} parent=469 // loop_pre_header
          _
        $region472: #{embeddings_forward.1} parent=469 // loop_header
          %s864 = sphi 0, %s868
          %p865 = scmp.ge.s32.totalorder %s864, 1
          %s869 = sphi %s858, %s858
          %s870 = sphi %s860, %s860
        $region473: #{embeddings_forward.1} parent=469 // loop_header_branch
          %867 = sbr.rel (%p865) target = $region477
        $region474: #{embeddings_forward.1} parent=469 // loop_body
          %v871 = vld [vmem:[%s869] sm:%s862]
          %872 = vst [vmem:[%s870] sm:%s862] %v871
        $region475: #{embeddings_forward.1} parent=469 // loop_footer
          %s868 = sadd.s32 1, %s864
        $region476: #{embeddings_forward.1} parent=469 // loop_footer_branch
          %863 = sbr.rel target = $region472
        $region477: #{embeddings_forward.1} parent=469 // loop_exit
          _
      $region470: #{embeddings_forward.1} parent=454 // pred_fallthru
        _
    $region455: #{embeddings_forward.1} parent=1 // pred_fallthru
      _
    // Predicated region
    $region456: #{embeddings_forward.1} parent=1 // pred_check
      %p836 = pneg %p832
    $region457: #{embeddings_forward.1} parent=1 // pred_check_branch
      %838 = sbr.rel (%p836) target = $region459
    $region458: #{embeddings_forward.1} parent=1 // pred_region
      %s839 = sshll.u32 1, 1
      %s840 = ssub.s32 %s839, 1
      loop: start=0, step=1, limit=1
      $region460: #{embeddings_forward.1} parent=458 // loop_pre_header
        _
      $region461: #{embeddings_forward.1} parent=458 // loop_header
        %s842 = sphi 0, %s846
        %p843 = scmp.ge.s32.totalorder %s842, 1
        %s847 = sphi %s829, %s829
        %s848 = sphi %s830, %s830
      $region462: #{embeddings_forward.1} parent=458 // loop_header_branch
        %845 = sbr.rel (%p843) target = $region466
      $region463: #{embeddings_forward.1} parent=458 // loop_body
        %v849 = vld [vmem:[%s847] sm:%s840]
        %850 = vst [vmem:[%s848] sm:%s840] %v849
      $region464: #{embeddings_forward.1} parent=458 // loop_footer
        %s846 = sadd.s32 1, %s842
      $region465: #{embeddings_forward.1} parent=458 // loop_footer_branch
        %841 = sbr.rel target = $region461
      $region466: #{embeddings_forward.1} parent=458 // loop_exit
        _
    $region459: #{embeddings_forward.1} parent=1 // pred_fallthru
      _
    // Predicated region
    $region478: #{embeddings_forward.1} parent=1 // pred_check
      _
    $region479: #{embeddings_forward.1} parent=1 // pred_check_branch
      %875 = sbr.rel (0) target = $region481
    $region480: #{embeddings_forward.1} parent=1 // pred_region
      %876 = vsyncadd [#allocation2], 16
    $region481: #{embeddings_forward.1} parent=1 // pred_fallthru
      _
    %s877 = smul.u32 16, 1
    %s878 = sshll.u32 %s877, 4
    %879 = dma.done [#allocation2], %s878
    %v880 = vld [vmem:[#allocation5] sm:$0xff]
    %v881 = vld [vmem:[#allocation5 + $0x8] sm:$0xff]
    %v882 = vmul.f32 %v880, 5.656854
    %v883 = vmul.f32 %v881, 5.656854
    %vm884 = vcmask 261120
    %885 = vst.msk [vmem:[#allocation5] sm:$0xff] %vm884, %v882
    %886 = vst.msk [vmem:[#allocation5 + $0x8] sm:$0xff] %vm884, %v883
    // Predicated region
    $region482: #{embeddings_forward.1} parent=1 // pred_check
      _
    $region483: #{embeddings_forward.1} parent=1 // pred_check_branch
      %888 = sbr.rel (0) target = $region485
    $region484: #{embeddings_forward.1} parent=1 // pred_region
      %s890 = ssub.s32 256, 256
      %891 = vsyncadd [#allocation6], %s890
      %s892 = sshll.u32 [#allocation5], 4
      %s893 = int_to_ptr.vmem [resolvable:$true] %s892
      %898 = dma.vmem_to_hbm [thread:$0]  %s893, 256, %s2, [#allocation6], 128, 128, 8
    $region485: #{embeddings_forward.1} parent=1 // pred_fallthru
      _
    // Predicated region
    $region486: #{embeddings_forward.1} parent=1 // pred_check
      _
    $region487: #{embeddings_forward.1} parent=1 // pred_check_branch
      %900 = sbr.rel (0) target = $region489
    $region488: #{embeddings_forward.1} parent=1 // pred_region
      %901 = dma.done [#allocation6], 256
    $region489: #{embeddings_forward.1} parent=1 // pred_fallthru
      _
    %902 = vsyncpa [#allocation6], 1
  %903 = vsyncmov [#allocation2]
  %s904 = vpop.sfrf %903
  %p905 = scmp.eq.s32.totalorder %s904, 0
  %p906 = pneg %p905
  %908 = shalt.err (%p906)

</llo_original>
